<compile_context>
chip_gen: v7x
topology: tpu7x:2x2x1
jax: 0.10.0
libtpu: 0.0.40
codegen_flags: <defaults>
</compile_context>

<pallas_src>
import math
import jax
import jax.numpy as jnp
from jax import lax
from jax.experimental import pallas as pl
from jax.experimental.pallas import tpu as pltpu


def _round_up(x, m):
    return (x + m - 1) // m * m


def ffn_kernel(x_ref, gamma_ref, beta_ref, w1_ref, b1_ref, w2_ref, b2_ref,
               o_ref, xn_ref, acc_ref):
    # Grid: (row tile i [parallel], hidden chunk k [arbitrary, reduction -> innermost]).
    k = pl.program_id(1)

    @pl.when(k == 0)
    def _init():
        # LayerNorm over the last dim, stats in f32 (eps = 1e-5, PyTorch default).
        # Computed once per row tile; normalized activations are cached in bf16 scratch
        # so every hidden chunk reuses them with no extra VPU work.
        x = x_ref[...].astype(jnp.float32)
        mean = jnp.mean(x, axis=-1, keepdims=True)
        var = jnp.mean((x - mean) ** 2, axis=-1, keepdims=True)
        xn = (x - mean) * lax.rsqrt(var + 1e-5)
        xn = xn * gamma_ref[...].astype(jnp.float32) + beta_ref[...].astype(jnp.float32)
        xn_ref[...] = xn.astype(xn_ref.dtype)            # bf16 MXU operand
        # Seed the accumulator with the output bias: finalize becomes a pure cast+store.
        acc_ref[...] = jnp.broadcast_to(b2_ref[...].astype(jnp.float32), acc_ref.shape)

    # Linear(dim -> hidden_chunk) on the MXU: bf16 operands, f32 accumulation.
    h = jnp.dot(xn_ref[...], w1_ref[...], preferred_element_type=jnp.float32)
    h = h + b1_ref[...].astype(jnp.float32)

    # Exact GELU: 0.5 * x * (1 + erf(x / sqrt(2))) in f32 (matches nn.GELU default).
    h = 0.5 * h * (1.0 + lax.erf(h * (1.0 / math.sqrt(2.0))))

    # Linear(hidden_chunk -> dim) on the MXU, accumulated into f32 VMEM scratch.
    acc_ref[...] += jnp.dot(h.astype(w2_ref.dtype), w2_ref[...],
                            preferred_element_type=jnp.float32)

    @pl.when(k == pl.num_programs(1) - 1)
    def _finalize():
        o_ref[...] = acc_ref[...].astype(o_ref.dtype)


def ffn_pallas(x, gamma, beta, w1, b1, w2, b2, *,
               row_tile=256, hidden_chunk=512, matmul_dtype=jnp.bfloat16):
    # x: (batch, seq, dim); weights pre-transposed: w1 (dim, hidden), w2 (hidden, dim).
    batch, seq, dim = x.shape
    hidden = w1.shape[1]

    rows = batch * seq
    # Clamp tiles to the problem size (multiple of 16 sublanes -> valid for f32 and bf16),
    # then zero-pad so no divisibility assert is needed.
    row_tile = min(row_tile, _round_up(rows, 16))
    rows_p = _round_up(rows, row_tile)
    hidden_chunk = min(hidden_chunk, _round_up(hidden, 128))
    hidden_p = _round_up(hidden, hidden_chunk)

    x2 = x.reshape(rows, dim)
    if rows_p != rows:
        x2 = jnp.pad(x2, ((0, rows_p - rows), (0, 0)))

    w1p, b1p, w2p = w1, b1, w2
    if hidden_p != hidden:
        # Zero-padded hidden units contribute exactly 0 (GELU(0)=0, zero W2 rows).
        w1p = jnp.pad(w1p, ((0, 0), (0, hidden_p - hidden)))
        b1p = jnp.pad(b1p, ((0, hidden_p - hidden),))
        w2p = jnp.pad(w2p, ((0, hidden_p - hidden), (0, 0)))

    # Pre-cast weights once in the wrapper: the kernel DMAs bf16 (half the HBM/VMEM
    # footprint) and the MXU runs native bf16 passes with an f32 accumulator.
    w1p = w1p.astype(matmul_dtype)
    w2p = w2p.astype(matmul_dtype)

    gamma2 = gamma.reshape(1, dim).astype(jnp.float32)
    beta2 = beta.reshape(1, dim).astype(jnp.float32)
    b1_2 = b1p.reshape(1, hidden_p).astype(jnp.float32)
    b2_2 = b2.reshape(1, dim).astype(jnp.float32)

    grid = (rows_p // row_tile, hidden_p // hidden_chunk)

    itemsize = jnp.dtype(x.dtype).itemsize
    cost = pl.CostEstimate(
        flops=4 * rows_p * dim * hidden_p,                       # two matmuls
        transcendentals=rows_p * hidden_p,                       # erf per hidden activation
        bytes_accessed=(rows_p * dim * itemsize * 2              # x in + y out
                        + 2 * dim * hidden_p * 2                 # bf16 W1 + W2
                        + (hidden_p + 3 * dim) * 4),             # biases + LN params
    )

    out2 = pl.pallas_call(
        ffn_kernel,
        out_shape=jax.ShapeDtypeStruct((rows_p, dim), x.dtype),
        grid_spec=pltpu.PrefetchScalarGridSpec(
            num_scalar_prefetch=0,
            grid=grid,
            in_specs=[
                pl.BlockSpec((row_tile, dim), lambda i, k: (i, 0)),        # x row tile
                pl.BlockSpec((1, dim), lambda i, k: (0, 0)),               # gamma
                pl.BlockSpec((1, dim), lambda i, k: (0, 0)),               # beta
                pl.BlockSpec((dim, hidden_chunk), lambda i, k: (0, k)),    # W1 chunk (in, out)
                pl.BlockSpec((1, hidden_chunk), lambda i, k: (0, k)),      # b1 chunk
                pl.BlockSpec((hidden_chunk, dim), lambda i, k: (k, 0)),    # W2 chunk (in, out)
                pl.BlockSpec((1, dim), lambda i, k: (0, 0)),               # b2
            ],
            out_specs=pl.BlockSpec((row_tile, dim), lambda i, k: (i, 0)),  # resident across k
            scratch_shapes=[
                pltpu.VMEM((row_tile, dim), matmul_dtype),   # cached normalized activations
                pltpu.VMEM((row_tile, dim), jnp.float32),    # output accumulator
            ],
        ),
        compiler_params=pltpu.CompilerParams(
            dimension_semantics=("parallel", "arbitrary"),
            # Explicit budget so large real configs don't silently spill (v7x: 64 MiB physical).
            vmem_limit_bytes=48 * 1024 * 1024,
        ),
        cost_estimate=cost,
    )(x2, gamma2, beta2, w1p, b1_2, w2p, b2_2)

    if rows_p != rows:
        out2 = out2[:rows]
    return out2.reshape(batch, seq, dim)


def init_params(key, dim, hidden_dim, dtype=jnp.float32):
    # Deterministic init mirroring PyTorch defaults:
    #   LayerNorm: gamma=1, beta=0
    #   Linear: U(-1/sqrt(fan_in), 1/sqrt(fan_in)) for weight and bias
    k1, k2, k3, k4 = jax.random.split(key, 4)
    gamma = jnp.ones((dim,), dtype)
    beta = jnp.zeros((dim,), dtype)
    bnd1 = 1.0 / math.sqrt(dim)
    w1 = jax.random.uniform(k1, (dim, hidden_dim), dtype, -bnd1, bnd1)   # (in, out)
    b1 = jax.random.uniform(k2, (hidden_dim,), dtype, -bnd1, bnd1)
    bnd2 = 1.0 / math.sqrt(hidden_dim)
    w2 = jax.random.uniform(k3, (hidden_dim, dim), dtype, -bnd2, bnd2)   # (in, out)
    b2 = jax.random.uniform(k4, (dim,), dtype, -bnd2, bnd2)
    return gamma, beta, w1, b1, w2, b2


def ffn_reference(x, gamma, beta, w1, b1, w2, b2, matmul_dtype=jnp.float32):
    # Pure-JAX reference. matmul_dtype=bfloat16 mirrors the kernel's mixed precision;
    # matmul_dtype=float32 is the exact PyTorch-equivalent math.
    xf = x.astype(jnp.float32)
    mean = jnp.mean(xf, axis=-1, keepdims=True)
    var = jnp.mean((xf - mean) ** 2, axis=-1, keepdims=True)
    xn = (xf - mean) * lax.rsqrt(var + 1e-5) * gamma + beta
    h = jnp.dot(xn.astype(matmul_dtype), w1.astype(matmul_dtype),
                preferred_element_type=jnp.float32) + b1
    h = 0.5 * h * (1.0 + lax.erf(h / math.sqrt(2.0)))
    y = jnp.dot(h.astype(matmul_dtype), w2.astype(matmul_dtype),
                preferred_element_type=jnp.float32) + b2
    return y.astype(x.dtype)


if __name__ == "__main__":
    # Small but TPU-friendly demo shapes: dim is a multiple of 128 (lane-dense output),
    # rows (batch*seq=200) and hidden (320) exercise the padding + hidden-chunk paths.
    batch, seq, dim, hidden = 2, 100, 128, 320

    key = jax.random.PRNGKey(0)
    kx, kp = jax.random.split(key)
    x = jax.random.normal(kx, (batch, seq, dim), jnp.float32)
    gamma, beta, w1, b1, w2, b2 = init_params(kp, dim, hidden)

    out = ffn_pallas(x, gamma, beta, w1, b1, w2, b2, row_tile=256, hidden_chunk=128)
    out = jax.block_until_ready(out)

    assert out.shape == (batch, seq, dim)
    assert bool(jnp.all(jnp.isfinite(out)))

    # Tight check against a reference using the same mixed precision (bf16 MXU operands,
    # f32 accumulation), plus a loose sanity check against the exact f32 math.
    ref_mixed = ffn_reference(x, gamma, beta, w1, b1, w2, b2, matmul_dtype=jnp.bfloat16)
    ref_f32 = ffn_reference(x, gamma, beta, w1, b1, w2, b2, matmul_dtype=jnp.float32)
    assert jnp.allclose(out, ref_mixed, atol=5e-3, rtol=5e-3), "mismatch vs mixed-precision reference"
    assert jnp.allclose(out, ref_f32, atol=3e-2, rtol=3e-2), "mismatch vs f32 reference"

    print("KERNEL_OK")
</pallas_src>

<mosaic_0001>
module attributes {stable_mosaic.version = 11 : i64} {
  func.func @ffn_kernel(%arg0: i32, %arg1: i32, %arg2: memref<208x128xf32, #tpu.memory_space<vmem>>, %arg3: memref<1x128xf32, #tpu.memory_space<vmem>>, %arg4: memref<1x128xf32, #tpu.memory_space<vmem>>, %arg5: memref<128x128xbf16, #tpu.memory_space<vmem>>, %arg6: memref<1x128xf32, #tpu.memory_space<vmem>>, %arg7: memref<128x128xbf16, #tpu.memory_space<vmem>>, %arg8: memref<1x128xf32, #tpu.memory_space<vmem>>, %arg9: memref<208x128xf32, #tpu.memory_space<vmem>>, %arg10: memref<208x128xbf16, #tpu.memory_space<vmem>>, %arg11: memref<208x128xf32, #tpu.memory_space<vmem>>) attributes {dimension_semantics = [#tpu.dimension_semantics<parallel>, #tpu.dimension_semantics<arbitrary>], iteration_bounds = array<i64: 1, 3>, scalar_prefetch = 0 : i64, scratch_operands = 2 : i64, tpu.core_type = #tpu.core_type<tc>, window_params = [{transform_indices = @transform_0, window_bounds = array<i64: 208, 128>}, {pipeline_mode = #tpu.pipeline_mode<synchronous>, transform_indices = @transform_1, window_bounds = array<i64: 1, 128>}, {pipeline_mode = #tpu.pipeline_mode<synchronous>, transform_indices = @transform_2, window_bounds = array<i64: 1, 128>}, {transform_indices = @transform_3, window_bounds = array<i64: 128, 128>}, {transform_indices = @transform_4, window_bounds = array<i64: 1, 128>}, {transform_indices = @transform_5, window_bounds = array<i64: 128, 128>}, {pipeline_mode = #tpu.pipeline_mode<synchronous>, transform_indices = @transform_6, window_bounds = array<i64: 1, 128>}, {transform_indices = @transform_7, window_bounds = array<i64: 208, 128>}]} {
    %c0_i32 = arith.constant 0 : i32
    %0 = arith.cmpi eq, %arg1, %c0_i32 : i32
    %1 = arith.extui %0 : i1 to i32
    %c0_i32_0 = arith.constant 0 : i32
    %2 = arith.cmpi ne, %1, %c0_i32_0 : i32
    scf.if %2 {
      %c0_17 = arith.constant 0 : index
      %c0_18 = arith.constant 0 : index
      %26 = vector.load %arg2[%c0_17, %c0_18] : memref<208x128xf32, #tpu.memory_space<vmem>>, vector<208x128xf32>
      %cst_19 = arith.constant dense<0.000000e+00> : vector<208xf32>
      %27 = vector.multi_reduction <add>, %26, %cst_19 [1] : vector<208x128xf32> to vector<208xf32>
      %28 = vector.shape_cast %27 : vector<208xf32> to vector<208x1xf32>
      %cst_20 = arith.constant 1.280000e+02 : f32
      %29 = vector.broadcast %cst_20 : f32 to vector<208x1xf32>
      %30 = arith.divf %28, %29 : vector<208x1xf32>
      %31 = vector.broadcast %30 : vector<208x1xf32> to vector<208x128xf32>
      %32 = arith.subf %26, %31 : vector<208x128xf32>
      %33 = arith.mulf %32, %32 : vector<208x128xf32>
      %cst_21 = arith.constant dense<0.000000e+00> : vector<208xf32>
      %34 = vector.multi_reduction <add>, %33, %cst_21 [1] : vector<208x128xf32> to vector<208xf32>
      %35 = vector.shape_cast %34 : vector<208xf32> to vector<208x1xf32>
      %cst_22 = arith.constant 1.280000e+02 : f32
      %36 = vector.broadcast %cst_22 : f32 to vector<208x1xf32>
      %37 = arith.divf %35, %36 : vector<208x1xf32>
      %38 = vector.broadcast %30 : vector<208x1xf32> to vector<208x128xf32>
      %39 = arith.subf %26, %38 : vector<208x128xf32>
      %cst_23 = arith.constant 9.99999974E-6 : f32
      %40 = vector.broadcast %cst_23 : f32 to vector<208x1xf32>
      %41 = arith.addf %37, %40 : vector<208x1xf32>
      %42 = math.rsqrt %41 : vector<208x1xf32>
      %43 = vector.broadcast %42 : vector<208x1xf32> to vector<208x128xf32>
      %44 = arith.mulf %39, %43 : vector<208x128xf32>
      %c0_24 = arith.constant 0 : index
      %c0_25 = arith.constant 0 : index
      %45 = vector.load %arg3[%c0_24, %c0_25] : memref<1x128xf32, #tpu.memory_space<vmem>>, vector<1x128xf32>
      %46 = vector.broadcast %45 : vector<1x128xf32> to vector<208x128xf32>
      %47 = arith.mulf %44, %46 : vector<208x128xf32>
      %c0_26 = arith.constant 0 : index
      %c0_27 = arith.constant 0 : index
      %48 = vector.load %arg4[%c0_26, %c0_27] : memref<1x128xf32, #tpu.memory_space<vmem>>, vector<1x128xf32>
      %49 = vector.broadcast %48 : vector<1x128xf32> to vector<208x128xf32>
      %50 = arith.addf %47, %49 : vector<208x128xf32>
      %51 = arith.truncf %50 : vector<208x128xf32> to vector<208x128xbf16>
      %c0_28 = arith.constant 0 : index
      %c0_29 = arith.constant 0 : index
      %52 = vector.load %arg10[%c0_28, %c0_29] : memref<208x128xbf16, #tpu.memory_space<vmem>>, vector<208x128xbf16>
      tpu.vector_store %arg10[%c0_28, %c0_29], %51 {strides = array<i32>} : memref<208x128xbf16, #tpu.memory_space<vmem>>, vector<208x128xbf16>,
      %c0_30 = arith.constant 0 : index
      %c0_31 = arith.constant 0 : index
      %53 = vector.load %arg8[%c0_30, %c0_31] : memref<1x128xf32, #tpu.memory_space<vmem>>, vector<1x128xf32>
      %54 = vector.shape_cast %53 : vector<1x128xf32> to vector<1x128xf32>
      %55 = vector.broadcast %54 : vector<1x128xf32> to vector<208x128xf32>
      %c0_32 = arith.constant 0 : index
      %c0_33 = arith.constant 0 : index
      %56 = vector.load %arg11[%c0_32, %c0_33] : memref<208x128xf32, #tpu.memory_space<vmem>>, vector<208x128xf32>
      tpu.vector_store %arg11[%c0_32, %c0_33], %55 {strides = array<i32>} : memref<208x128xf32, #tpu.memory_space<vmem>>, vector<208x128xf32>,
    } else {
    }
    %c0 = arith.constant 0 : index
    %c0_1 = arith.constant 0 : index
    %3 = vector.load %arg10[%c0, %c0_1] : memref<208x128xbf16, #tpu.memory_space<vmem>>, vector<208x128xbf16>
    %c0_2 = arith.constant 0 : index
    %c0_3 = arith.constant 0 : index
    %4 = vector.load %arg5[%c0_2, %c0_3] : memref<128x128xbf16, #tpu.memory_space<vmem>>, vector<128x128xbf16>
    %cst = arith.constant dense<0.000000e+00> : vector<208x128xf32>
    %5 = tpu.matmul %3, %4, %cst {dimension_numbers = #tpu.dot_dimension_numbers<[1], [0], [0], [1], [0, 0, 1, 1], [], []>} : vector<208x128xbf16>, vector<128x128xbf16>, vector<208x128xf32> -> vector<208x128xf32>
    %c0_4 = arith.constant 0 : index
    %c0_5 = arith.constant 0 : index
    %6 = vector.load %arg6[%c0_4, %c0_5] : memref<1x128xf32, #tpu.memory_space<vmem>>, vector<1x128xf32>
    %7 = vector.broadcast %6 : vector<1x128xf32> to vector<208x128xf32>
    %8 = arith.addf %5, %7 : vector<208x128xf32>
    %cst_6 = arith.constant 5.000000e-01 : f32
    %9 = vector.broadcast %cst_6 : f32 to vector<208x128xf32>
    %10 = arith.mulf %9, %8 : vector<208x128xf32>
    %cst_7 = arith.constant 0.707106769 : f32
    %11 = vector.broadcast %cst_7 : f32 to vector<208x128xf32>
    %12 = arith.mulf %8, %11 : vector<208x128xf32>
    %13 = math.erf %12 : vector<208x128xf32>
    %cst_8 = arith.constant 1.000000e+00 : f32
    %14 = vector.broadcast %cst_8 : f32 to vector<208x128xf32>
    %15 = arith.addf %14, %13 : vector<208x128xf32>
    %16 = arith.mulf %10, %15 : vector<208x128xf32>
    %c0_9 = arith.constant 0 : index
    %c0_10 = arith.constant 0 : index
    %17 = vector.load %arg11[%c0_9, %c0_10] : memref<208x128xf32, #tpu.memory_space<vmem>>, vector<208x128xf32>
    %18 = arith.truncf %16 : vector<208x128xf32> to vector<208x128xbf16>
    %c0_11 = arith.constant 0 : index
    %c0_12 = arith.constant 0 : index
    %19 = vector.load %arg7[%c0_11, %c0_12] : memref<128x128xbf16, #tpu.memory_space<vmem>>, vector<128x128xbf16>
    %cst_13 = arith.constant dense<0.000000e+00> : vector<208x128xf32>
    %20 = tpu.matmul %18, %19, %cst_13 {dimension_numbers = #tpu.dot_dimension_numbers<[1], [0], [0], [1], [0, 0, 1, 1], [], []>} : vector<208x128xbf16>, vector<128x128xbf16>, vector<208x128xf32> -> vector<208x128xf32>
    %21 = arith.addf %17, %20 : vector<208x128xf32>
    %c0_14 = arith.constant 0 : index
    %c0_15 = arith.constant 0 : index
    %22 = vector.load %arg11[%c0_14, %c0_15] : memref<208x128xf32, #tpu.memory_space<vmem>>, vector<208x128xf32>
    tpu.vector_store %arg11[%c0_14, %c0_15], %21 {strides = array<i32>} : memref<208x128xf32, #tpu.memory_space<vmem>>, vector<208x128xf32>,
    %c2_i32 = arith.constant 2 : i32
    %23 = arith.cmpi eq, %arg1, %c2_i32 : i32
    %24 = arith.extui %23 : i1 to i32
    %c0_i32_16 = arith.constant 0 : i32
    %25 = arith.cmpi ne, %24, %c0_i32_16 : i32
    scf.if %25 {
      %c0_17 = arith.constant 0 : index
      %c0_18 = arith.constant 0 : index
      %26 = vector.load %arg11[%c0_17, %c0_18] : memref<208x128xf32, #tpu.memory_space<vmem>>, vector<208x128xf32>
      %c0_19 = arith.constant 0 : index
      %c0_20 = arith.constant 0 : index
      %27 = vector.load %arg9[%c0_19, %c0_20] : memref<208x128xf32, #tpu.memory_space<vmem>>, vector<208x128xf32>
      tpu.vector_store %arg9[%c0_19, %c0_20], %26 {strides = array<i32>} : memref<208x128xf32, #tpu.memory_space<vmem>>, vector<208x128xf32>,
    } else {
    }
    return
  }
  func.func @transform_0(%arg0: i32, %arg1: i32) -> (i32, i32) {
    %c0_i32 = arith.constant 0 : i32
    %c0_i32_0 = arith.constant 0 : i32
    return %arg0, %c0_i32 : i32, i32
  }
  func.func @transform_1(%arg0: i32, %arg1: i32) -> (i32, i32) {
    %c0_i32 = arith.constant 0 : i32
    %c0_i32_0 = arith.constant 0 : i32
    %c0_i32_1 = arith.constant 0 : i32
    return %c0_i32, %c0_i32_0 : i32, i32
  }
  func.func @transform_2(%arg0: i32, %arg1: i32) -> (i32, i32) {
    %c0_i32 = arith.constant 0 : i32
    %c0_i32_0 = arith.constant 0 : i32
    %c0_i32_1 = arith.constant 0 : i32
    return %c0_i32, %c0_i32_0 : i32, i32
  }
  func.func @transform_3(%arg0: i32, %arg1: i32) -> (i32, i32) {
    %c0_i32 = arith.constant 0 : i32
    %c0_i32_0 = arith.constant 0 : i32
    return %c0_i32, %arg1 : i32, i32
  }
  func.func @transform_4(%arg0: i32, %arg1: i32) -> (i32, i32) {
    %c0_i32 = arith.constant 0 : i32
    %c0_i32_0 = arith.constant 0 : i32
    return %c0_i32, %arg1 : i32, i32
  }
  func.func @transform_5(%arg0: i32, %arg1: i32) -> (i32, i32) {
    %c0_i32 = arith.constant 0 : i32
    %c0_i32_0 = arith.constant 0 : i32
    return %arg1, %c0_i32 : i32, i32
  }
  func.func @transform_6(%arg0: i32, %arg1: i32) -> (i32, i32) {
    %c0_i32 = arith.constant 0 : i32
    %c0_i32_0 = arith.constant 0 : i32
    %c0_i32_1 = arith.constant 0 : i32
    return %c0_i32, %c0_i32_0 : i32, i32
  }
  func.func @transform_7(%arg0: i32, %arg1: i32) -> (i32, i32) {
    %c0_i32 = arith.constant 0 : i32
    %c0_i32_0 = arith.constant 0 : i32
    return %arg0, %c0_i32 : i32, i32
  }
}

</mosaic_0001>

<llo_original>
// kernel: tpu_custom_call.1
$region0: #{tpu_custom_call.1}
  #allocation0 [shape = 'u32[]', space=smem, size = 0x4, offset = 0x4, fixed_abs, tag = 'smem constant byte address 0x4 - core index']
  #allocation1 [shape = 'u32[144,128]{1,0:T(1,128)}', space=vmem, size = 0x12000, scoped, tag = 'internal scratch']
  #allocation2 [shape = 'bf16[208,128]{1,0:T(16,128)(2,1)}', space=vmem, size = 0xd000, scoped, tag = 'scratch operand']
  #allocation3 [shape = 'f32[208,128]{1,0:T(8,128)}', space=vmem, size = 0x1a000, scoped, tag = 'scratch operand']
  %s0 = inlined_call_operand.hbm [shape: f32[208,128], index: 0, kind: input, shape index: {}]
  %s1 = inlined_call_operand.vmem [shape: f32[1,128], index: 1, kind: input, shape index: {}]
  %s2 = inlined_call_operand.vmem [shape: f32[1,128], index: 2, kind: input, shape index: {}]
  %s3 = inlined_call_operand.hbm [shape: bf16[128,384], index: 3, kind: input, shape index: {}]
  %s4 = inlined_call_operand.vmem [shape: f32[1,384], index: 4, kind: input, shape index: {}]
  %s5 = inlined_call_operand.hbm [shape: bf16[384,128], index: 5, kind: input, shape index: {}]
  %s6 = inlined_call_operand.vmem [shape: f32[1,128], index: 6, kind: input, shape index: {}]
  %s7 = inlined_call_operand.hbm [shape: f32[208,128], index: 7, kind: output, shape index: {}]
  %s8 = sld [smem:[#allocation0]]
  $region81: #{tpu_custom_call.1} parent=0
    _
  %s10 = ssub.s32 1, %s8
  %s11 = scalar_select 0, %s10, %s8
  $region1: #{tpu_custom_call.1} parent=0
    #allocation4 [shape = 'u8[106496]{0}', space=vmem, size = 0x1a000, scoped, tag = 'input window, operand 0, single buffered']
    #allocation5 [shape = 's32[2]{0}', space=sflag, size = 0x8, scoped, tag = 'scoped memory for tpu_custom_call.1']
    #allocation6 [shape = 's32[2]{0}', space=sflag, size = 0x8, scoped, tag = 'scoped memory for tpu_custom_call.1']
    #allocation7 [shape = 'u8[65536]{0}', space=vmem, size = 0x10000, scoped, tag = 'input window, operand 3']
    #allocation8 [shape = 's32[2]{0}', space=sflag, size = 0x8, scoped, tag = 'scoped memory for tpu_custom_call.1']
    #allocation9 [shape = 'u8[65536]{0}', space=vmem, size = 0x10000, scoped, tag = 'input window, operand 5']
    #allocation10 [shape = 'u8[106496]{0}', space=vmem, size = 0x1a000, scoped, tag = 'output window, operand 0, single buffered']
    %12 = vsyncpa [#allocation5], 0
    %13 = vsyncpa [#allocation8], 0
    %s14 = scalar_lea.sflag [#allocation8], 1
    %15 = vsyncpa %s14, 0
    %16 = vsyncpa [#allocation6], 0
    loop: start=0, step=1, limit=5
    $region2: #{tpu_custom_call.1} parent=1 // loop_pre_header
      _
    $region3: #{tpu_custom_call.1} parent=1 // loop_header
      %s18 = sphi 0, %s22
      %p19 = scmp.ge.s32.totalorder %s18, 5
      %s25 = sphi 0, %s37
      %s26 = sphi 0, %s33
      %s27 = sphi 0, %s25
      %s28 = sphi 0, %s26
      %s29 = sphi 0, %s27
      %s30 = sphi 0, %s28
      %s40 = sphi 0, %s42
      %s43 = sphi 0, %s40
      %s44 = sphi 0, %s43
      %s60 = sphi 0, %s44
      %s64 = sphi 0, %s64
      %s66 = sphi 0, %s64
      %s67 = sphi 0, %s66
      %s81 = sphi 0, %s67
      %s85 = sphi 0, %s85
      %s87 = sphi 0, %s85
      %s88 = sphi 0, %s87
      %s102 = sphi 0, %s88
      %s108 = sphi 0, %s110
      %s111 = sphi 0, %s108
      %s112 = sphi 0, %s111
      %s128 = sphi 0, %s112
      %s134 = sphi 0, %s136
      %s137 = sphi 0, %s134
      %s138 = sphi 0, %s137
      %s154 = sphi 0, %s138
      %s160 = sphi 0, %s162
      %s163 = sphi 0, %s160
      %s164 = sphi 0, %s163
      %s180 = sphi 0, %s164
      %s184 = sphi 0, %s184
      %s186 = sphi 0, %s184
      %s187 = sphi 0, %s186
      %s201 = sphi 0, %s187
      %s207 = sphi 0, %s209
      %s210 = sphi 0, %s207
      %s211 = sphi 0, %s210
      %s227 = sphi 0, %s211
    $region4: #{tpu_custom_call.1} parent=1 // loop_header_branch
      %21 = sbr.rel (%p19) target = $region8
    $region5: #{tpu_custom_call.1} parent=1 // loop_body
      %s23 = ssub.s32 %s18, 1
      %s24 = ssub.s32 %s18, 2
      %s31 = sadd.s32 1, %s26
      %p32 = scmp.ge.s32.totalorder %s31, 3
      %s33 = scalar_select %p32, 0, %s31
      %s34 = sadd.s32 1, %s25
      %s35 = scalar_select %p32, %s34, %s25
      %p36 = scmp.ge.s32.totalorder %s35, 1
      %s37 = scalar_select %p36, 0, %s35
      %s38 = ssub.s32 %s25, %s37
      %p39 = scmp.eq.s32.totalorder %s38, 0
      %s41 = sadd.s32 %s40, 1
      %s42 = scalar_select %p39, %s40, %s41
      %p45 = pneg %p39
      %p46 = scmp.eq.s32.totalorder %s18, 2
      %p47 = por %p45, %p46
      %p48 = scmp.ne.s32.totalorder %s40, %s43
      %p49 = scmp.eq.s32.totalorder %s18, 0
      %p50 = por %p48, %p49
      %p51 = scmp.ne.s32.totalorder %s40, %s43
      %p52 = scmp.eq.s32.totalorder %s23, 2
      %p53 = por %p51, %p52
      %p54 = scmp.ne.s32.totalorder %s43, %s44
      %p55 = scmp.eq.s32.totalorder %s23, 0
      %p56 = por %p54, %p55
      %p57 = scmp.ne.s32.totalorder %s43, %s44
      %p58 = scmp.eq.s32.totalorder %s24, 2
      %p59 = por %p57, %p58
      %p61 = scmp.ne.s32.totalorder %s44, %s60
      %p62 = scmp.eq.s32.totalorder %s24, 0
      %p63 = por %p61, %p62
      %s65 = sadd.s32 %s64, 1
      %p68 = scmp.eq.s32.totalorder %s18, 2
      %p69 = scmp.ne.s32.totalorder %s64, %s66
      %p70 = scmp.eq.s32.totalorder %s18, 0
      %p71 = por %p69, %p70
      %p72 = scmp.ne.s32.totalorder %s64, %s66
      %p73 = scmp.eq.s32.totalorder %s23, 2
      %p74 = por %p72, %p73
      %p75 = scmp.ne.s32.totalorder %s66, %s67
      %p76 = scmp.eq.s32.totalorder %s23, 0
      %p77 = por %p75, %p76
      %p78 = scmp.ne.s32.totalorder %s66, %s67
      %p79 = scmp.eq.s32.totalorder %s24, 2
      %p80 = por %p78, %p79
      %p82 = scmp.ne.s32.totalorder %s67, %s81
      %p83 = scmp.eq.s32.totalorder %s24, 0
      %p84 = por %p82, %p83
      %s86 = sadd.s32 %s85, 1
      %p89 = scmp.eq.s32.totalorder %s18, 2
      %p90 = scmp.ne.s32.totalorder %s85, %s87
      %p91 = scmp.eq.s32.totalorder %s18, 0
      %p92 = por %p90, %p91
      %p93 = scmp.ne.s32.totalorder %s85, %s87
      %p94 = scmp.eq.s32.totalorder %s23, 2
      %p95 = por %p93, %p94
      %p96 = scmp.ne.s32.totalorder %s87, %s88
      %p97 = scmp.eq.s32.totalorder %s23, 0
      %p98 = por %p96, %p97
      %p99 = scmp.ne.s32.totalorder %s87, %s88
      %p100 = scmp.eq.s32.totalorder %s24, 2
      %p101 = por %p99, %p100
      %p103 = scmp.ne.s32.totalorder %s88, %s102
      %p104 = scmp.eq.s32.totalorder %s24, 0
      %p105 = por %p103, %p104
      %s106 = ssub.s32 %s26, %s33
      %p107 = scmp.eq.s32.totalorder %s106, 0
      %s109 = sadd.s32 %s108, 1
      %s110 = scalar_select %p107, %s108, %s109
      %p113 = pneg %p107
      %p114 = scmp.eq.s32.totalorder %s18, 2
      %p115 = por %p113, %p114
      %p116 = scmp.ne.s32.totalorder %s108, %s111
      %p117 = scmp.eq.s32.totalorder %s18, 0
      %p118 = por %p116, %p117
      %p119 = scmp.ne.s32.totalorder %s108, %s111
      %p120 = scmp.eq.s32.totalorder %s23, 2
      %p121 = por %p119, %p120
      %p122 = scmp.ne.s32.totalorder %s111, %s112
      %p123 = scmp.eq.s32.totalorder %s23, 0
      %p124 = por %p122, %p123
      %p125 = scmp.ne.s32.totalorder %s111, %s112
      %p126 = scmp.eq.s32.totalorder %s24, 2
      %p127 = por %p125, %p126
      %p129 = scmp.ne.s32.totalorder %s112, %s128
      %p130 = scmp.eq.s32.totalorder %s24, 0
      %p131 = por %p129, %p130
      %s132 = ssub.s32 %s26, %s33
      %p133 = scmp.eq.s32.totalorder %s132, 0
      %s135 = sadd.s32 %s134, 1
      %s136 = scalar_select %p133, %s134, %s135
      %p139 = pneg %p133
      %p140 = scmp.eq.s32.totalorder %s18, 2
      %p141 = por %p139, %p140
      %p142 = scmp.ne.s32.totalorder %s134, %s137
      %p143 = scmp.eq.s32.totalorder %s18, 0
      %p144 = por %p142, %p143
      %p145 = scmp.ne.s32.totalorder %s134, %s137
      %p146 = scmp.eq.s32.totalorder %s23, 2
      %p147 = por %p145, %p146
      %p148 = scmp.ne.s32.totalorder %s137, %s138
      %p149 = scmp.eq.s32.totalorder %s23, 0
      %p150 = por %p148, %p149
      %p151 = scmp.ne.s32.totalorder %s137, %s138
      %p152 = scmp.eq.s32.totalorder %s24, 2
      %p153 = por %p151, %p152
      %p155 = scmp.ne.s32.totalorder %s138, %s154
      %p156 = scmp.eq.s32.totalorder %s24, 0
      %p157 = por %p155, %p156
      %s158 = ssub.s32 %s26, %s33
      %p159 = scmp.eq.s32.totalorder %s158, 0
      %s161 = sadd.s32 %s160, 1
      %s162 = scalar_select %p159, %s160, %s161
      %p165 = pneg %p159
      %p166 = scmp.eq.s32.totalorder %s18, 2
      %p167 = por %p165, %p166
      %p168 = scmp.ne.s32.totalorder %s160, %s163
      %p169 = scmp.eq.s32.totalorder %s18, 0
      %p170 = por %p168, %p169
      %p171 = scmp.ne.s32.totalorder %s160, %s163
      %p172 = scmp.eq.s32.totalorder %s23, 2
      %p173 = por %p171, %p172
      %p174 = scmp.ne.s32.totalorder %s163, %s164
      %p175 = scmp.eq.s32.totalorder %s23, 0
      %p176 = por %p174, %p175
      %p177 = scmp.ne.s32.totalorder %s163, %s164
      %p178 = scmp.eq.s32.totalorder %s24, 2
      %p179 = por %p177, %p178
      %p181 = scmp.ne.s32.totalorder %s164, %s180
      %p182 = scmp.eq.s32.totalorder %s24, 0
      %p183 = por %p181, %p182
      %s185 = sadd.s32 %s184, 1
      %p188 = scmp.eq.s32.totalorder %s18, 2
      %p189 = scmp.ne.s32.totalorder %s184, %s186
      %p190 = scmp.eq.s32.totalorder %s18, 0
      %p191 = por %p189, %p190
      %p192 = scmp.ne.s32.totalorder %s184, %s186
      %p193 = scmp.eq.s32.totalorder %s23, 2
      %p194 = por %p192, %p193
      %p195 = scmp.ne.s32.totalorder %s186, %s187
      %p196 = scmp.eq.s32.totalorder %s23, 0
      %p197 = por %p195, %p196
      %p198 = scmp.ne.s32.totalorder %s186, %s187
      %p199 = scmp.eq.s32.totalorder %s24, 2
      %p200 = por %p198, %p199
      %p202 = scmp.ne.s32.totalorder %s187, %s201
      %p203 = scmp.eq.s32.totalorder %s24, 0
      %p204 = por %p202, %p203
      %s205 = ssub.s32 %s25, %s37
      %p206 = scmp.eq.s32.totalorder %s205, 0
      %s208 = sadd.s32 %s207, 1
      %s209 = scalar_select %p206, %s207, %s208
      %p212 = pneg %p206
      %p213 = scmp.eq.s32.totalorder %s18, 2
      %p214 = por %p212, %p213
      %p215 = scmp.ne.s32.totalorder %s207, %s210
      %p216 = scmp.eq.s32.totalorder %s18, 0
      %p217 = por %p215, %p216
      %p218 = scmp.ne.s32.totalorder %s207, %s210
      %p219 = scmp.eq.s32.totalorder %s23, 2
      %p220 = por %p218, %p219
      %p221 = scmp.ne.s32.totalorder %s210, %s211
      %p222 = scmp.eq.s32.totalorder %s23, 0
      %p223 = por %p221, %p222
      %p224 = scmp.ne.s32.totalorder %s210, %s211
      %p225 = scmp.eq.s32.totalorder %s24, 2
      %p226 = por %p224, %p225
      %p228 = scmp.ne.s32.totalorder %s211, %s227
      %p229 = scmp.eq.s32.totalorder %s24, 0
      %p230 = por %p228, %p229
      %p231 = scmp.le.s32.totalorder 1, %s18
      %p232 = scmp.lt.s32.totalorder %s18, 4
      %p233 = pnand %p231, %p232
      %p234 = pneg %p233
      // Predicated region
      $region9: #{tpu_custom_call.1} parent=5 // pred_check
        _
      $region10: #{tpu_custom_call.1} parent=5 // pred_check_branch
        %236 = sbr.rel (%p233) target = $region12
      $region11: #{tpu_custom_call.1} parent=5 // pred_region
        %s237 = ssub.s32 %s18, 1
        // Predicated region
        $region13: #{tpu_custom_call.1} parent=11 // pred_check
          %p238 = pneg %p56
        $region14: #{tpu_custom_call.1} parent=11 // pred_check_branch
          %240 = sbr.rel (%p238) target = $region16
        $region15: #{tpu_custom_call.1} parent=11 // pred_region
          %s241 = smul.u32 26, %s27
          %s243 = ssub.s32 3328, 3328
          %244 = vsyncadd [#allocation5], %s243
          %s245 = smul.addr %s241, 128
          %s246 = scalar_lea.hbm %s0, %s245
          %s247 = sshll.u32 [#allocation4], 4
          %s248 = int_to_ptr.vmem [resolvable:$true] %s247
          %253 = dma.hbm_to_vmem [thread:$0]  %s246, 3328, %s248, [#allocation5], 128, 128, 8
        $region16: #{tpu_custom_call.1} parent=11 // pred_fallthru
          _
        // Predicated region
        $region17: #{tpu_custom_call.1} parent=11 // pred_check
          %p254 = pneg %p77
        $region18: #{tpu_custom_call.1} parent=11 // pred_check_branch
          %256 = sbr.rel (%p254) target = $region20
        $region19: #{tpu_custom_call.1} parent=11 // pred_region
          _
        $region20: #{tpu_custom_call.1} parent=11 // pred_fallthru
          _
        // Predicated region
        $region21: #{tpu_custom_call.1} parent=11 // pred_check
          %p257 = pneg %p98
        $region22: #{tpu_custom_call.1} parent=11 // pred_check_branch
          %259 = sbr.rel (%p257) target = $region24
        $region23: #{tpu_custom_call.1} parent=11 // pred_region
          _
        $region24: #{tpu_custom_call.1} parent=11 // pred_fallthru
          _
        // Predicated region
        $region25: #{tpu_custom_call.1} parent=11 // pred_check
          %p260 = pneg %p197
        $region26: #{tpu_custom_call.1} parent=11 // pred_check_branch
          %262 = sbr.rel (%p260) target = $region28
        $region27: #{tpu_custom_call.1} parent=11 // pred_region
          _
        $region28: #{tpu_custom_call.1} parent=11 // pred_fallthru
          _
      $region12: #{tpu_custom_call.1} parent=5 // pred_fallthru
        _
      %p263 = scmp.lt.s32.totalorder %s18, 3
      // Predicated region
      $region29: #{tpu_custom_call.1} parent=5 // pred_check
        %p264 = pneg %p263
      $region30: #{tpu_custom_call.1} parent=5 // pred_check_branch
        %266 = sbr.rel (%p264) target = $region32
      $region31: #{tpu_custom_call.1} parent=5 // pred_region
        // Predicated region
        $region33: #{tpu_custom_call.1} parent=31 // pred_check
          %p267 = pneg %p118
        $region34: #{tpu_custom_call.1} parent=31 // pred_check_branch
          %269 = sbr.rel (%p267) target = $region36
        $region35: #{tpu_custom_call.1} parent=31 // pred_region
          %s270 = sand.u32 %s18, 1
          %s271 = scalar_lea.sflag [#allocation8], %s270
          %s272 = sand.u32 %s108, 1
          %s273 = smul.addr %s272, 64
          %s274 = scalar_lea.vmem [#allocation7], %s273
          %s276 = ssub.s32 1024, 1024
          %277 = vsyncadd %s271, %s276
          %s278 = smul.addr %s26, 64
          %s279 = scalar_lea.hbm %s3, %s278
          %s280 = sshll.u32 %s274, 4
          %s281 = int_to_ptr.vmem [resolvable:$true] %s280
          %286 = dma.hbm_to_vmem [thread:$0]  %s279, 1024, %s281, %s271, 192, 64, 4
        $region36: #{tpu_custom_call.1} parent=31 // pred_fallthru
          _
        // Predicated region
        $region37: #{tpu_custom_call.1} parent=31 // pred_check
          %p287 = pneg %p144
        $region38: #{tpu_custom_call.1} parent=31 // pred_check_branch
          %289 = sbr.rel (%p287) target = $region40
        $region39: #{tpu_custom_call.1} parent=31 // pred_region
          %p290 = scmp.lt.s32.totalorder %s26, 2
          %s291 = scalar_select %p290, %s26, 2
          %s292 = scalar_lea.vmem %s4, %s291
        $region40: #{tpu_custom_call.1} parent=31 // pred_fallthru
          _
        // Predicated region
        $region41: #{tpu_custom_call.1} parent=31 // pred_check
          %p293 = pneg %p170
        $region42: #{tpu_custom_call.1} parent=31 // pred_check_branch
          %295 = sbr.rel (%p293) target = $region44
        $region43: #{tpu_custom_call.1} parent=31 // pred_region
          %s296 = sand.u32 %s18, 1
          %s297 = scalar_lea.sflag [#allocation8], %s296
          %s298 = sand.u32 %s160, 1
          %s299 = smul.addr %s298, 64
          %s300 = scalar_lea.vmem [#allocation9], %s299
          %s301 = smul.u32 16, %s26
          %s303 = ssub.s32 1024, 1024
          %304 = vsyncadd %s297, %s303
          %s305 = smul.addr %s301, 64
          %s306 = scalar_lea.hbm %s5, %s305
          %s307 = sshll.u32 %s300, 4
          %s308 = int_to_ptr.vmem [resolvable:$true] %s307
          %313 = dma.hbm_to_vmem [thread:$0]  %s306, 1024, %s308, %s297, 64, 64, 4
        $region44: #{tpu_custom_call.1} parent=31 // pred_fallthru
          _
      $region32: #{tpu_custom_call.1} parent=5 // pred_fallthru
        _
      %p314 = scmp.le.s32.totalorder 1, %s18
      %p315 = scmp.lt.s32.totalorder %s18, 4
      %p316 = pnand %p314, %p315
      %p317 = pneg %p316
      // Predicated region
      $region45: #{tpu_custom_call.1} parent=5 // pred_check
        _
      $region46: #{tpu_custom_call.1} parent=5 // pred_check_branch
        %319 = sbr.rel (%p316) target = $region48
      $region47: #{tpu_custom_call.1} parent=5 // pred_region
        %s320 = ssub.s32 %s18, 1
        // Predicated region
        $region49: #{tpu_custom_call.1} parent=47 // pred_check
          %p321 = pneg %p56
        $region50: #{tpu_custom_call.1} parent=47 // pred_check_branch
          %323 = sbr.rel (%p321) target = $region52
        $region51: #{tpu_custom_call.1} parent=47 // pred_region
          %324 = dma.done [#allocation5], 3328
        $region52: #{tpu_custom_call.1} parent=47 // pred_fallthru
          _
        %s325 = sand.u32 %s23, 1
        %s326 = scalar_lea.sflag [#allocation8], %s325
        %s327 = sand.u32 %s111, 1
        %s328 = smul.addr %s327, 64
        %s329 = scalar_lea.vmem [#allocation7], %s328
        // Predicated region
        $region53: #{tpu_custom_call.1} parent=47 // pred_check
          %p330 = pneg %p124
        $region54: #{tpu_custom_call.1} parent=47 // pred_check_branch
          %332 = sbr.rel (%p330) target = $region56
        $region55: #{tpu_custom_call.1} parent=47 // pred_region
          %333 = dma.done %s326, 1024
        $region56: #{tpu_custom_call.1} parent=47 // pred_fallthru
          _
        %s334 = sand.u32 %s23, 1
        %s335 = scalar_lea.sflag [#allocation8], %s334
        %s336 = sand.u32 %s163, 1
        %s337 = smul.addr %s336, 64
        %s338 = scalar_lea.vmem [#allocation9], %s337
        // Predicated region
        $region57: #{tpu_custom_call.1} parent=47 // pred_check
          %p339 = pneg %p176
        $region58: #{tpu_custom_call.1} parent=47 // pred_check_branch
          %341 = sbr.rel (%p339) target = $region60
        $region59: #{tpu_custom_call.1} parent=47 // pred_region
          %342 = dma.done %s335, 1024
        $region60: #{tpu_custom_call.1} parent=47 // pred_fallthru
          _
        %p343 = pneg %p56
        %p344 = pneg %p53
        %p345 = pneg %p77
        %p346 = pneg %p74
        %p347 = pneg %p98
        %p348 = pneg %p95
        %s349 = sand.u32 %s23, 1
        %s350 = scalar_lea.sflag [#allocation8], %s349
        %s351 = sand.u32 %s111, 1
        %s352 = smul.addr %s351, 64
        %s353 = scalar_lea.vmem [#allocation7], %s352
        %p354 = pneg %p124
        %p355 = pneg %p121
        %p356 = scmp.lt.s32.totalorder %s28, 2
        %s357 = scalar_select %p356, %s28, 2
        %s358 = scalar_lea.vmem %s4, %s357
        %p359 = pneg %p150
        %p360 = pneg %p147
        %s361 = sand.u32 %s23, 1
        %s362 = scalar_lea.sflag [#allocation8], %s361
        %s363 = sand.u32 %s163, 1
        %s364 = smul.addr %s363, 64
        %s365 = scalar_lea.vmem [#allocation9], %s364
        %p366 = pneg %p176
        %p367 = pneg %p173
        %p368 = pneg %p197
        %p369 = pneg %p194
        %p370 = pneg %p223
        %p371 = pneg %p220
        %s372 = smul.u32 26, %s27
        %p373 = scmp.lt.s32.totalorder %s28, 2
        %s374 = scalar_select %p373, %s28, 2
        %s375 = scalar_lea.vmem %s4, %s374
        %s376 = smul.u32 16, %s28
        %s377 = smul.u32 26, %s27
        %p379 = scmp.eq.s32.totalorder %s28, 0
        // Predicated region
        $region61: #{tpu_custom_call.1} parent=47 // pred_check
          %p380 = pneg %p379
        $region62: #{tpu_custom_call.1} parent=47 // pred_check_branch
          %382 = sbr.rel (%p380) target = $region64
        $region63: #{tpu_custom_call.1} parent=47 // pred_region
          %v383 = vld [vmem:[#allocation4] sm:$0xff]
          %v384 = vld [vmem:[#allocation4 + $0x8] sm:$0xff]
          %v385 = vld [vmem:[#allocation4 + $0x10] sm:$0xff]
          %v386 = vld [vmem:[#allocation4 + $0x18] sm:$0xff]
          %v387 = vld [vmem:[#allocation4 + $0x20] sm:$0xff]
          %v388 = vld [vmem:[#allocation4 + $0x28] sm:$0xff]
          %v389 = vld [vmem:[#allocation4 + $0x30] sm:$0xff]
          %v390 = vld [vmem:[#allocation4 + $0x38] sm:$0xff]
          %v391 = vld [vmem:[#allocation4 + $0x40] sm:$0xff]
          %v392 = vld [vmem:[#allocation4 + $0x48] sm:$0xff]
          %v393 = vld [vmem:[#allocation4 + $0x50] sm:$0xff]
          %v394 = vld [vmem:[#allocation4 + $0x58] sm:$0xff]
          %v395 = vld [vmem:[#allocation4 + $0x60] sm:$0xff]
          %v396 = vld [vmem:[#allocation4 + $0x68] sm:$0xff]
          %v397 = vld [vmem:[#allocation4 + $0x70] sm:$0xff]
          %v398 = vld [vmem:[#allocation4 + $0x78] sm:$0xff]
          %v399 = vld [vmem:[#allocation4 + $0x80] sm:$0xff]
          %v400 = vld [vmem:[#allocation4 + $0x88] sm:$0xff]
          %v401 = vld [vmem:[#allocation4 + $0x90] sm:$0xff]
          %v402 = vld [vmem:[#allocation4 + $0x98] sm:$0xff]
          %v403 = vld [vmem:[#allocation4 + $0xa0] sm:$0xff]
          %v404 = vld [vmem:[#allocation4 + $0xa8] sm:$0xff]
          %v405 = vld [vmem:[#allocation4 + $0xb0] sm:$0xff]
          %v406 = vld [vmem:[#allocation4 + $0xb8] sm:$0xff]
          %v407 = vld [vmem:[#allocation4 + $0xc0] sm:$0xff]
          %v408 = vld [vmem:[#allocation4 + $0xc8] sm:$0xff]
          %409 = vadd.xlane.f32.xlu0 %v383
          %v410 = vpop.xlane.xlu0 %409
          %411 = vadd.xlane.f32.xlu0 %v384
          %v412 = vpop.xlane.xlu0 %411
          %413 = vadd.xlane.f32.xlu0 %v385
          %v414 = vpop.xlane.xlu0 %413
          %415 = vadd.xlane.f32.xlu0 %v386
          %v416 = vpop.xlane.xlu0 %415
          %417 = vadd.xlane.f32.xlu0 %v387
          %v418 = vpop.xlane.xlu0 %417
          %419 = vadd.xlane.f32.xlu0 %v388
          %v420 = vpop.xlane.xlu0 %419
          %421 = vadd.xlane.f32.xlu0 %v389
          %v422 = vpop.xlane.xlu0 %421
          %423 = vadd.xlane.f32.xlu0 %v390
          %v424 = vpop.xlane.xlu0 %423
          %425 = vadd.xlane.f32.xlu0 %v391
          %v426 = vpop.xlane.xlu0 %425
          %427 = vadd.xlane.f32.xlu0 %v392
          %v428 = vpop.xlane.xlu0 %427
          %429 = vadd.xlane.f32.xlu0 %v393
          %v430 = vpop.xlane.xlu0 %429
          %431 = vadd.xlane.f32.xlu0 %v394
          %v432 = vpop.xlane.xlu0 %431
          %433 = vadd.xlane.f32.xlu0 %v395
          %v434 = vpop.xlane.xlu0 %433
          %435 = vadd.xlane.f32.xlu0 %v396
          %v436 = vpop.xlane.xlu0 %435
          %437 = vadd.xlane.f32.xlu0 %v397
          %v438 = vpop.xlane.xlu0 %437
          %439 = vadd.xlane.f32.xlu0 %v398
          %v440 = vpop.xlane.xlu0 %439
          %441 = vadd.xlane.f32.xlu0 %v399
          %v442 = vpop.xlane.xlu0 %441
          %443 = vadd.xlane.f32.xlu0 %v400
          %v444 = vpop.xlane.xlu0 %443
          %445 = vadd.xlane.f32.xlu0 %v401
          %v446 = vpop.xlane.xlu0 %445
          %447 = vadd.xlane.f32.xlu0 %v402
          %v448 = vpop.xlane.xlu0 %447
          %449 = vadd.xlane.f32.xlu0 %v403
          %v450 = vpop.xlane.xlu0 %449
          %451 = vadd.xlane.f32.xlu0 %v404
          %v452 = vpop.xlane.xlu0 %451
          %453 = vadd.xlane.f32.xlu0 %v405
          %v454 = vpop.xlane.xlu0 %453
          %455 = vadd.xlane.f32.xlu0 %v406
          %v456 = vpop.xlane.xlu0 %455
          %457 = vadd.xlane.f32.xlu0 %v407
          %v458 = vpop.xlane.xlu0 %457
          %459 = vadd.xlane.f32.xlu0 %v408
          %v460 = vpop.xlane.xlu0 %459
          %v461 = vrcp.pop 128.0
          %v462 = vmul.f32 %v410, %v461
          %v463 = vmul.f32 %v412, %v461
          %v464 = vmul.f32 %v414, %v461
          %v465 = vmul.f32 %v416, %v461
          %v466 = vmul.f32 %v418, %v461
          %v467 = vmul.f32 %v420, %v461
          %v468 = vmul.f32 %v422, %v461
          %v469 = vmul.f32 %v424, %v461
          %v470 = vmul.f32 %v426, %v461
          %v471 = vmul.f32 %v428, %v461
          %v472 = vmul.f32 %v430, %v461
          %v473 = vmul.f32 %v432, %v461
          %v474 = vmul.f32 %v434, %v461
          %v475 = vmul.f32 %v436, %v461
          %v476 = vmul.f32 %v438, %v461
          %v477 = vmul.f32 %v440, %v461
          %v478 = vmul.f32 %v442, %v461
          %v479 = vmul.f32 %v444, %v461
          %v480 = vmul.f32 %v446, %v461
          %v481 = vmul.f32 %v448, %v461
          %v482 = vmul.f32 %v450, %v461
          %v483 = vmul.f32 %v452, %v461
          %v484 = vmul.f32 %v454, %v461
          %v485 = vmul.f32 %v456, %v461
          %v486 = vmul.f32 %v458, %v461
          %v487 = vmul.f32 %v460, %v461
          %v488 = vsub.f32 %v383, %v462
          %v489 = vsub.f32 %v384, %v463
          %v490 = vsub.f32 %v385, %v464
          %v491 = vsub.f32 %v386, %v465
          %v492 = vsub.f32 %v387, %v466
          %v493 = vsub.f32 %v388, %v467
          %v494 = vsub.f32 %v389, %v468
          %v495 = vsub.f32 %v390, %v469
          %v496 = vsub.f32 %v391, %v470
          %v497 = vsub.f32 %v392, %v471
          %v498 = vsub.f32 %v393, %v472
          %v499 = vsub.f32 %v394, %v473
          %v500 = vsub.f32 %v395, %v474
          %v501 = vsub.f32 %v396, %v475
          %v502 = vsub.f32 %v397, %v476
          %v503 = vsub.f32 %v398, %v477
          %v504 = vsub.f32 %v399, %v478
          %v505 = vsub.f32 %v400, %v479
          %v506 = vsub.f32 %v401, %v480
          %v507 = vsub.f32 %v402, %v481
          %v508 = vsub.f32 %v403, %v482
          %v509 = vsub.f32 %v404, %v483
          %v510 = vsub.f32 %v405, %v484
          %v511 = vsub.f32 %v406, %v485
          %v512 = vsub.f32 %v407, %v486
          %v513 = vsub.f32 %v408, %v487
          %v514 = vmul.f32 %v488, %v488
          %v515 = vmul.f32 %v489, %v489
          %v516 = vmul.f32 %v490, %v490
          %v517 = vmul.f32 %v491, %v491
          %v518 = vmul.f32 %v492, %v492
          %v519 = vmul.f32 %v493, %v493
          %v520 = vmul.f32 %v494, %v494
          %v521 = vmul.f32 %v495, %v495
          %v522 = vmul.f32 %v496, %v496
          %v523 = vmul.f32 %v497, %v497
          %v524 = vmul.f32 %v498, %v498
          %v525 = vmul.f32 %v499, %v499
          %v526 = vmul.f32 %v500, %v500
          %v527 = vmul.f32 %v501, %v501
          %v528 = vmul.f32 %v502, %v502
          %v529 = vmul.f32 %v503, %v503
          %v530 = vmul.f32 %v504, %v504
          %v531 = vmul.f32 %v505, %v505
          %v532 = vmul.f32 %v506, %v506
          %v533 = vmul.f32 %v507, %v507
          %v534 = vmul.f32 %v508, %v508
          %v535 = vmul.f32 %v509, %v509
          %v536 = vmul.f32 %v510, %v510
          %v537 = vmul.f32 %v511, %v511
          %v538 = vmul.f32 %v512, %v512
          %v539 = vmul.f32 %v513, %v513
          %540 = vadd.xlane.f32.xlu0 %v514
          %v541 = vpop.xlane.xlu0 %540
          %542 = vadd.xlane.f32.xlu0 %v515
          %v543 = vpop.xlane.xlu0 %542
          %544 = vadd.xlane.f32.xlu0 %v516
          %v545 = vpop.xlane.xlu0 %544
          %546 = vadd.xlane.f32.xlu0 %v517
          %v547 = vpop.xlane.xlu0 %546
          %548 = vadd.xlane.f32.xlu0 %v518
          %v549 = vpop.xlane.xlu0 %548
          %550 = vadd.xlane.f32.xlu0 %v519
          %v551 = vpop.xlane.xlu0 %550
          %552 = vadd.xlane.f32.xlu0 %v520
          %v553 = vpop.xlane.xlu0 %552
          %554 = vadd.xlane.f32.xlu0 %v521
          %v555 = vpop.xlane.xlu0 %554
          %556 = vadd.xlane.f32.xlu0 %v522
          %v557 = vpop.xlane.xlu0 %556
          %558 = vadd.xlane.f32.xlu0 %v523
          %v559 = vpop.xlane.xlu0 %558
          %560 = vadd.xlane.f32.xlu0 %v524
          %v561 = vpop.xlane.xlu0 %560
          %562 = vadd.xlane.f32.xlu0 %v525
          %v563 = vpop.xlane.xlu0 %562
          %564 = vadd.xlane.f32.xlu0 %v526
          %v565 = vpop.xlane.xlu0 %564
          %566 = vadd.xlane.f32.xlu0 %v527
          %v567 = vpop.xlane.xlu0 %566
          %568 = vadd.xlane.f32.xlu0 %v528
          %v569 = vpop.xlane.xlu0 %568
          %570 = vadd.xlane.f32.xlu0 %v529
          %v571 = vpop.xlane.xlu0 %570
          %572 = vadd.xlane.f32.xlu0 %v530
          %v573 = vpop.xlane.xlu0 %572
          %574 = vadd.xlane.f32.xlu0 %v531
          %v575 = vpop.xlane.xlu0 %574
          %576 = vadd.xlane.f32.xlu0 %v532
          %v577 = vpop.xlane.xlu0 %576
          %578 = vadd.xlane.f32.xlu0 %v533
          %v579 = vpop.xlane.xlu0 %578
          %580 = vadd.xlane.f32.xlu0 %v534
          %v581 = vpop.xlane.xlu0 %580
          %582 = vadd.xlane.f32.xlu0 %v535
          %v583 = vpop.xlane.xlu0 %582
          %584 = vadd.xlane.f32.xlu0 %v536
          %v585 = vpop.xlane.xlu0 %584
          %586 = vadd.xlane.f32.xlu0 %v537
          %v587 = vpop.xlane.xlu0 %586
          %588 = vadd.xlane.f32.xlu0 %v538
          %v589 = vpop.xlane.xlu0 %588
          %590 = vadd.xlane.f32.xlu0 %v539
          %v591 = vpop.xlane.xlu0 %590
          %v592 = vmul.f32 %v541, %v461
          %v593 = vmul.f32 %v543, %v461
          %v594 = vmul.f32 %v545, %v461
          %v595 = vmul.f32 %v547, %v461
          %v596 = vmul.f32 %v549, %v461
          %v597 = vmul.f32 %v551, %v461
          %v598 = vmul.f32 %v553, %v461
          %v599 = vmul.f32 %v555, %v461
          %v600 = vmul.f32 %v557, %v461
          %v601 = vmul.f32 %v559, %v461
          %v602 = vmul.f32 %v561, %v461
          %v603 = vmul.f32 %v563, %v461
          %v604 = vmul.f32 %v565, %v461
          %v605 = vmul.f32 %v567, %v461
          %v606 = vmul.f32 %v569, %v461
          %v607 = vmul.f32 %v571, %v461
          %v608 = vmul.f32 %v573, %v461
          %v609 = vmul.f32 %v575, %v461
          %v610 = vmul.f32 %v577, %v461
          %v611 = vmul.f32 %v579, %v461
          %v612 = vmul.f32 %v581, %v461
          %v613 = vmul.f32 %v583, %v461
          %v614 = vmul.f32 %v585, %v461
          %v615 = vmul.f32 %v587, %v461
          %v616 = vmul.f32 %v589, %v461
          %v617 = vmul.f32 %v591, %v461
          %v618 = vadd.f32 %v592, 1e-05
          %v619 = vadd.f32 %v593, 1e-05
          %v620 = vadd.f32 %v594, 1e-05
          %v621 = vadd.f32 %v595, 1e-05
          %v622 = vadd.f32 %v596, 1e-05
          %v623 = vadd.f32 %v597, 1e-05
          %v624 = vadd.f32 %v598, 1e-05
          %v625 = vadd.f32 %v599, 1e-05
          %v626 = vadd.f32 %v600, 1e-05
          %v627 = vadd.f32 %v601, 1e-05
          %v628 = vadd.f32 %v602, 1e-05
          %v629 = vadd.f32 %v603, 1e-05
          %v630 = vadd.f32 %v604, 1e-05
          %v631 = vadd.f32 %v605, 1e-05
          %v632 = vadd.f32 %v606, 1e-05
          %v633 = vadd.f32 %v607, 1e-05
          %v634 = vadd.f32 %v608, 1e-05
          %v635 = vadd.f32 %v609, 1e-05
          %v636 = vadd.f32 %v610, 1e-05
          %v637 = vadd.f32 %v611, 1e-05
          %v638 = vadd.f32 %v612, 1e-05
          %v639 = vadd.f32 %v613, 1e-05
          %v640 = vadd.f32 %v614, 1e-05
          %v641 = vadd.f32 %v615, 1e-05
          %v642 = vadd.f32 %v616, 1e-05
          %v643 = vadd.f32 %v617, 1e-05
          %v644 = vrsqrt.pop %v618
          %v645 = vrsqrt.pop %v619
          %v646 = vrsqrt.pop %v620
          %v647 = vrsqrt.pop %v621
          %v648 = vrsqrt.pop %v622
          %v649 = vrsqrt.pop %v623
          %v650 = vrsqrt.pop %v624
          %v651 = vrsqrt.pop %v625
          %v652 = vrsqrt.pop %v626
          %v653 = vrsqrt.pop %v627
          %v654 = vrsqrt.pop %v628
          %v655 = vrsqrt.pop %v629
          %v656 = vrsqrt.pop %v630
          %v657 = vrsqrt.pop %v631
          %v658 = vrsqrt.pop %v632
          %v659 = vrsqrt.pop %v633
          %v660 = vrsqrt.pop %v634
          %v661 = vrsqrt.pop %v635
          %v662 = vrsqrt.pop %v636
          %v663 = vrsqrt.pop %v637
          %v664 = vrsqrt.pop %v638
          %v665 = vrsqrt.pop %v639
          %v666 = vrsqrt.pop %v640
          %v667 = vrsqrt.pop %v641
          %v668 = vrsqrt.pop %v642
          %v669 = vrsqrt.pop %v643
          %v670 = vmul.f32 %v488, %v644
          %v671 = vmul.f32 %v489, %v645
          %v672 = vmul.f32 %v490, %v646
          %v673 = vmul.f32 %v491, %v647
          %v674 = vmul.f32 %v492, %v648
          %v675 = vmul.f32 %v493, %v649
          %v676 = vmul.f32 %v494, %v650
          %v677 = vmul.f32 %v495, %v651
          %v678 = vmul.f32 %v496, %v652
          %v679 = vmul.f32 %v497, %v653
          %v680 = vmul.f32 %v498, %v654
          %v681 = vmul.f32 %v499, %v655
          %v682 = vmul.f32 %v500, %v656
          %v683 = vmul.f32 %v501, %v657
          %v684 = vmul.f32 %v502, %v658
          %v685 = vmul.f32 %v503, %v659
          %v686 = vmul.f32 %v504, %v660
          %v687 = vmul.f32 %v505, %v661
          %v688 = vmul.f32 %v506, %v662
          %v689 = vmul.f32 %v507, %v663
          %v690 = vmul.f32 %v508, %v664
          %v691 = vmul.f32 %v509, %v665
          %v692 = vmul.f32 %v510, %v666
          %v693 = vmul.f32 %v511, %v667
          %v694 = vmul.f32 %v512, %v668
          %v695 = vmul.f32 %v513, %v669
          %v696 = vld [vmem:[%s1] sm:$0x1]
          %v698 = vlaneseq
          %v699 = vshrl.u32 %v698, 7
          %v700 = vsub.s32 0, %v699
          %v701 = vrot.slane %v696, %v700
          %v703 = vmul.f32 %v670, %v701
          %v704 = vmul.f32 %v671, %v701
          %v705 = vmul.f32 %v672, %v701
          %v706 = vmul.f32 %v673, %v701
          %v707 = vmul.f32 %v674, %v701
          %v708 = vmul.f32 %v675, %v701
          %v709 = vmul.f32 %v676, %v701
          %v710 = vmul.f32 %v677, %v701
          %v711 = vmul.f32 %v678, %v701
          %v712 = vmul.f32 %v679, %v701
          %v713 = vmul.f32 %v680, %v701
          %v714 = vmul.f32 %v681, %v701
          %v715 = vmul.f32 %v682, %v701
          %v716 = vmul.f32 %v683, %v701
          %v717 = vmul.f32 %v684, %v701
          %v718 = vmul.f32 %v685, %v701
          %v719 = vmul.f32 %v686, %v701
          %v720 = vmul.f32 %v687, %v701
          %v721 = vmul.f32 %v688, %v701
          %v722 = vmul.f32 %v689, %v701
          %v723 = vmul.f32 %v690, %v701
          %v724 = vmul.f32 %v691, %v701
          %v725 = vmul.f32 %v692, %v701
          %v726 = vmul.f32 %v693, %v701
          %v727 = vmul.f32 %v694, %v701
          %v728 = vmul.f32 %v695, %v701
          %v729 = vld [vmem:[%s2] sm:$0x1]
          %v731 = vlaneseq
          %v732 = vshrl.u32 %v731, 7
          %v733 = vsub.s32 0, %v732
          %v734 = vrot.slane %v729, %v733
          %v736 = vadd.f32 %v703, %v734
          %v737 = vadd.f32 %v704, %v734
          %v738 = vadd.f32 %v705, %v734
          %v739 = vadd.f32 %v706, %v734
          %v740 = vadd.f32 %v707, %v734
          %v741 = vadd.f32 %v708, %v734
          %v742 = vadd.f32 %v709, %v734
          %v743 = vadd.f32 %v710, %v734
          %v744 = vadd.f32 %v711, %v734
          %v745 = vadd.f32 %v712, %v734
          %v746 = vadd.f32 %v713, %v734
          %v747 = vadd.f32 %v714, %v734
          %v748 = vadd.f32 %v715, %v734
          %v749 = vadd.f32 %v716, %v734
          %v750 = vadd.f32 %v717, %v734
          %v751 = vadd.f32 %v718, %v734
          %v752 = vadd.f32 %v719, %v734
          %v753 = vadd.f32 %v720, %v734
          %v754 = vadd.f32 %v721, %v734
          %v755 = vadd.f32 %v722, %v734
          %v756 = vadd.f32 %v723, %v734
          %v757 = vadd.f32 %v724, %v734
          %v758 = vadd.f32 %v725, %v734
          %v759 = vadd.f32 %v726, %v734
          %v760 = vadd.f32 %v727, %v734
          %v761 = vadd.f32 %v728, %v734
          %v762 = vpack.c.bf16 %v737, %v736
          %v763 = vpack.c.bf16 %v739, %v738
          %v764 = vpack.c.bf16 %v741, %v740
          %v765 = vpack.c.bf16 %v743, %v742
          %v766 = vpack.c.bf16 %v745, %v744
          %v767 = vpack.c.bf16 %v747, %v746
          %v768 = vpack.c.bf16 %v749, %v748
          %v769 = vpack.c.bf16 %v751, %v750
          %v770 = vpack.c.bf16 %v753, %v752
          %v771 = vpack.c.bf16 %v755, %v754
          %v772 = vpack.c.bf16 %v757, %v756
          %v773 = vpack.c.bf16 %v759, %v758
          %v774 = vpack.c.bf16 %v761, %v760
          %775 = vst [vmem:[#allocation2] sm:$0xff] %v762
          %776 = vst [vmem:[#allocation2 + $0x8] sm:$0xff] %v763
          %777 = vst [vmem:[#allocation2 + $0x10] sm:$0xff] %v764
          %778 = vst [vmem:[#allocation2 + $0x18] sm:$0xff] %v765
          %779 = vst [vmem:[#allocation2 + $0x20] sm:$0xff] %v766
          %780 = vst [vmem:[#allocation2 + $0x28] sm:$0xff] %v767
          %781 = vst [vmem:[#allocation2 + $0x30] sm:$0xff] %v768
          %782 = vst [vmem:[#allocation2 + $0x38] sm:$0xff] %v769
          %783 = vst [vmem:[#allocation2 + $0x40] sm:$0xff] %v770
          %784 = vst [vmem:[#allocation2 + $0x48] sm:$0xff] %v771
          %785 = vst [vmem:[#allocation2 + $0x50] sm:$0xff] %v772
          %786 = vst [vmem:[#allocation2 + $0x58] sm:$0xff] %v773
          %787 = vst [vmem:[#allocation2 + $0x60] sm:$0xff] %v774
          %v788 = vld [vmem:[%s6] sm:$0x1]
          %v790 = vlaneseq
          %v791 = vshrl.u32 %v790, 7
          %v792 = vsub.s32 0, %v791
          %v793 = vrot.slane %v788, %v792
          %795 = vst [vmem:[#allocation3] sm:$0xff] %v793
          %796 = vst [vmem:[#allocation3 + $0x8] sm:$0xff] %v793
          %797 = vst [vmem:[#allocation3 + $0x10] sm:$0xff] %v793
          %798 = vst [vmem:[#allocation3 + $0x18] sm:$0xff] %v793
          %799 = vst [vmem:[#allocation3 + $0x20] sm:$0xff] %v793
          %800 = vst [vmem:[#allocation3 + $0x28] sm:$0xff] %v793
          %801 = vst [vmem:[#allocation3 + $0x30] sm:$0xff] %v793
          %802 = vst [vmem:[#allocation3 + $0x38] sm:$0xff] %v793
          %803 = vst [vmem:[#allocation3 + $0x40] sm:$0xff] %v793
          %804 = vst [vmem:[#allocation3 + $0x48] sm:$0xff] %v793
          %805 = vst [vmem:[#allocation3 + $0x50] sm:$0xff] %v793
          %806 = vst [vmem:[#allocation3 + $0x58] sm:$0xff] %v793
          %807 = vst [vmem:[#allocation3 + $0x60] sm:$0xff] %v793
          %808 = vst [vmem:[#allocation3 + $0x68] sm:$0xff] %v793
          %809 = vst [vmem:[#allocation3 + $0x70] sm:$0xff] %v793
          %810 = vst [vmem:[#allocation3 + $0x78] sm:$0xff] %v793
          %811 = vst [vmem:[#allocation3 + $0x80] sm:$0xff] %v793
          %812 = vst [vmem:[#allocation3 + $0x88] sm:$0xff] %v793
          %813 = vst [vmem:[#allocation3 + $0x90] sm:$0xff] %v793
          %814 = vst [vmem:[#allocation3 + $0x98] sm:$0xff] %v793
          %815 = vst [vmem:[#allocation3 + $0xa0] sm:$0xff] %v793
          %816 = vst [vmem:[#allocation3 + $0xa8] sm:$0xff] %v793
          %817 = vst [vmem:[#allocation3 + $0xb0] sm:$0xff] %v793
          %818 = vst [vmem:[#allocation3 + $0xb8] sm:$0xff] %v793
          %819 = vst [vmem:[#allocation3 + $0xc0] sm:$0xff] %v793
          %820 = vst [vmem:[#allocation3 + $0xc8] sm:$0xff] %v793
        $region64: #{tpu_custom_call.1} parent=47 // pred_fallthru
          _
        %v821 = vld [vmem:[#allocation2] sm:$0xff]
        %v822 = vld [vmem:[#allocation2 + $0x8] sm:$0xff]
        %v823 = vld [vmem:[#allocation2 + $0x10] sm:$0xff]
        %v824 = vld [vmem:[#allocation2 + $0x18] sm:$0xff]
        %v825 = vld [vmem:[#allocation2 + $0x20] sm:$0xff]
        %v826 = vld [vmem:[#allocation2 + $0x28] sm:$0xff]
        %v827 = vld [vmem:[#allocation2 + $0x30] sm:$0xff]
        %v828 = vld [vmem:[#allocation2 + $0x38] sm:$0xff]
        %v829 = vld [vmem:[#allocation2 + $0x40] sm:$0xff]
        %v830 = vld [vmem:[#allocation2 + $0x48] sm:$0xff]
        %v831 = vld [vmem:[#allocation2 + $0x50] sm:$0xff]
        %v832 = vld [vmem:[#allocation2 + $0x58] sm:$0xff]
        %v833 = vld [vmem:[#allocation2 + $0x60] sm:$0xff]
        %v834 = vld [vmem:[%s329] sm:$0xf]
        %v835 = vld [vmem:[%s329 + $0x4] sm:$0xf]
        %v836 = vld [vmem:[%s329 + $0x8] sm:$0xf]
        %v837 = vld [vmem:[%s329 + $0xc] sm:$0xf]
        %v838 = vld [vmem:[%s329 + $0x10] sm:$0xf]
        %v839 = vld [vmem:[%s329 + $0x14] sm:$0xf]
        %v840 = vld [vmem:[%s329 + $0x18] sm:$0xf]
        %v841 = vld [vmem:[%s329 + $0x1c] sm:$0xf]
        %v842 = vld [vmem:[%s329 + $0x20] sm:$0xf]
        %v843 = vld [vmem:[%s329 + $0x24] sm:$0xf]
        %v844 = vld [vmem:[%s329 + $0x28] sm:$0xf]
        %v845 = vld [vmem:[%s329 + $0x2c] sm:$0xf]
        %v846 = vld [vmem:[%s329 + $0x30] sm:$0xf]
        %v847 = vld [vmem:[%s329 + $0x34] sm:$0xf]
        %v848 = vld [vmem:[%s329 + $0x38] sm:$0xf]
        %v849 = vld [vmem:[%s329 + $0x3c] sm:$0xf]
        %v850 = vld [vmem:[%s375] sm:$0x1]
        %v852 = vlaneseq
        %v853 = vshrl.u32 %v852, 7
        %v854 = vsub.s32 0, %v853
        %v855 = vrot.slane %v850, %v854
        %v873 = vunpack.c.l.b16 %v834
        %v874 = vunpack.c.l.b16 %v835
        %v875 = vunpack.c.l.b16 %v836
        %v876 = vunpack.c.l.b16 %v837
        %v877 = vunpack.c.l.b16 %v838
        %v878 = vunpack.c.l.b16 %v839
        %v879 = vunpack.c.l.b16 %v840
        %v880 = vunpack.c.l.b16 %v841
        %v881 = vunpack.c.l.b16 %v842
        %v882 = vunpack.c.l.b16 %v843
        %v883 = vunpack.c.l.b16 %v844
        %v884 = vunpack.c.l.b16 %v845
        %v885 = vunpack.c.l.b16 %v846
        %v886 = vunpack.c.l.b16 %v847
        %v887 = vunpack.c.l.b16 %v848
        %v888 = vunpack.c.l.b16 %v849
        %v889 = vpack.c.b16 %v874, %v873
        %v890 = vpack.c.b16 %v876, %v875
        %v891 = vpack.c.b16 %v878, %v877
        %v892 = vpack.c.b16 %v880, %v879
        %v893 = vpack.c.b16 %v882, %v881
        %v894 = vpack.c.b16 %v884, %v883
        %v895 = vpack.c.b16 %v886, %v885
        %v896 = vpack.c.b16 %v888, %v887
        %905 = vmatprep.subr.bf16.mxu0 0
        %906 = vmatpush1.bf16.msra.mxu0 %v889
        %907 = vmatprep.subr.bf16.mxu0 0
        %908 = vmatpush1.bf16.msra.mxu0 %v890
        %909 = vmatprep.subr.bf16.mxu0 0
        %910 = vmatpush1.bf16.msra.mxu0 %v891
        %911 = vmatprep.subr.bf16.mxu0 0
        %912 = vmatpush1.bf16.msra.mxu0 %v892
        %913 = vmatprep.subr.bf16.mxu0 0
        %914 = vmatpush1.bf16.msra.mxu0 %v893
        %915 = vmatprep.subr.bf16.mxu0 0
        %916 = vmatpush1.bf16.msra.mxu0 %v894
        %917 = vmatprep.subr.bf16.mxu0 0
        %918 = vmatpush1.bf16.msra.mxu0 %v895
        %919 = vmatprep.subr.bf16.mxu0 0
        %920 = vmatpush1.bf16.msra.mxu0 %v896
        %921 = vmatprep.subr.bf16.mxu0 0
        %922 = vmatpush1.bf16.msra.mxu0 0
        %923 = vmatprep.subr.bf16.mxu0 0
        %924 = vmatpush1.bf16.msra.mxu0 0
        %925 = vmatprep.subr.bf16.mxu0 0
        %926 = vmatpush1.bf16.msra.mxu0 0
        %927 = vmatprep.subr.bf16.mxu0 0
        %928 = vmatpush1.bf16.msra.mxu0 0
        %929 = vmatprep.subr.bf16.mxu0 0
        %930 = vmatpush1.bf16.msra.mxu0 0
        %931 = vmatprep.subr.bf16.mxu0 0
        %932 = vmatpush1.bf16.msra.mxu0 0
        %933 = vmatprep.subr.bf16.mxu0 0
        %934 = vmatpush1.bf16.msra.mxu0 0
        %935 = vmatprep.subr.bf16.mxu0 0
        %936 = vmatpush1.bf16.msra.mxu0 0
        %937 = vmatprep.mubr.bf16.mxu0 0
        %938 = vmatmul.mubr.bf16.gmra.mrb[0].mxu0 %v821
        %v939 = vpop.f32.mrb[0].mxu0
        %v940 = vadd.f32 %v855, %v939
        %v941 = vpop.f32.mrb[0].mxu0
        %v942 = vpop.f32.mrb[0].mxu0
        %v943 = vadd.f32 %v855, %v942
        %v944 = vpop.f32.mrb[0].mxu0
        %945 = vmatprep.mubr.bf16.mxu0 0
        %946 = vmatmul.mubr.bf16.gmra.mrb[0].mxu0 %v822
        %v947 = vpop.f32.mrb[0].mxu0
        %v948 = vadd.f32 %v855, %v947
        %v949 = vpop.f32.mrb[0].mxu0
        %v950 = vpop.f32.mrb[0].mxu0
        %v951 = vadd.f32 %v855, %v950
        %v952 = vpop.f32.mrb[0].mxu0
        %953 = vmatprep.mubr.bf16.mxu0 0
        %954 = vmatmul.mubr.bf16.gmra.mrb[0].mxu0 %v823
        %v955 = vpop.f32.mrb[0].mxu0
        %v956 = vadd.f32 %v855, %v955
        %v957 = vpop.f32.mrb[0].mxu0
        %v958 = vpop.f32.mrb[0].mxu0
        %v959 = vadd.f32 %v855, %v958
        %v960 = vpop.f32.mrb[0].mxu0
        %961 = vmatprep.mubr.bf16.mxu0 0
        %962 = vmatmul.mubr.bf16.gmra.mrb[0].mxu0 %v824
        %v963 = vpop.f32.mrb[0].mxu0
        %v964 = vadd.f32 %v855, %v963
        %v965 = vpop.f32.mrb[0].mxu0
        %v966 = vpop.f32.mrb[0].mxu0
        %v967 = vadd.f32 %v855, %v966
        %v968 = vpop.f32.mrb[0].mxu0
        %969 = vmatprep.mubr.bf16.mxu0 0
        %970 = vmatmul.mubr.bf16.gmra.mrb[0].mxu0 %v825
        %v971 = vpop.f32.mrb[0].mxu0
        %v972 = vadd.f32 %v855, %v971
        %v973 = vpop.f32.mrb[0].mxu0
        %v974 = vpop.f32.mrb[0].mxu0
        %v975 = vadd.f32 %v855, %v974
        %v976 = vpop.f32.mrb[0].mxu0
        %977 = vmatprep.mubr.bf16.mxu0 0
        %978 = vmatmul.mubr.bf16.gmra.mrb[0].mxu0 %v826
        %v979 = vpop.f32.mrb[0].mxu0
        %v980 = vadd.f32 %v855, %v979
        %v981 = vpop.f32.mrb[0].mxu0
        %v982 = vpop.f32.mrb[0].mxu0
        %v983 = vadd.f32 %v855, %v982
        %v984 = vpop.f32.mrb[0].mxu0
        %985 = vmatprep.mubr.bf16.mxu0 0
        %986 = vmatmul.mubr.bf16.gmra.mrb[0].mxu0 %v827
        %v987 = vpop.f32.mrb[0].mxu0
        %v988 = vadd.f32 %v855, %v987
        %v989 = vpop.f32.mrb[0].mxu0
        %v990 = vpop.f32.mrb[0].mxu0
        %v991 = vadd.f32 %v855, %v990
        %v992 = vpop.f32.mrb[0].mxu0
        %993 = vmatprep.mubr.bf16.mxu0 0
        %994 = vmatmul.mubr.bf16.gmra.mrb[0].mxu0 %v828
        %v995 = vpop.f32.mrb[0].mxu0
        %v996 = vadd.f32 %v855, %v995
        %v997 = vpop.f32.mrb[0].mxu0
        %v998 = vpop.f32.mrb[0].mxu0
        %v999 = vadd.f32 %v855, %v998
        %v1000 = vpop.f32.mrb[0].mxu0
        %1001 = vmatprep.mubr.bf16.mxu0 0
        %1002 = vmatmul.mubr.bf16.gmra.mrb[0].mxu0 %v829
        %v1003 = vpop.f32.mrb[0].mxu0
        %v1004 = vadd.f32 %v855, %v1003
        %v1005 = vpop.f32.mrb[0].mxu0
        %v1006 = vpop.f32.mrb[0].mxu0
        %v1007 = vadd.f32 %v855, %v1006
        %v1008 = vpop.f32.mrb[0].mxu0
        %1009 = vmatprep.mubr.bf16.mxu0 0
        %1010 = vmatmul.mubr.bf16.gmra.mrb[0].mxu0 %v830
        %v1011 = vpop.f32.mrb[0].mxu0
        %v1012 = vadd.f32 %v855, %v1011
        %v1013 = vpop.f32.mrb[0].mxu0
        %v1014 = vpop.f32.mrb[0].mxu0
        %v1015 = vadd.f32 %v855, %v1014
        %v1016 = vpop.f32.mrb[0].mxu0
        %1017 = vmatprep.mubr.bf16.mxu0 0
        %1018 = vmatmul.mubr.bf16.gmra.mrb[0].mxu0 %v831
        %v1019 = vpop.f32.mrb[0].mxu0
        %v1020 = vadd.f32 %v855, %v1019
        %v1021 = vpop.f32.mrb[0].mxu0
        %v1022 = vpop.f32.mrb[0].mxu0
        %v1023 = vadd.f32 %v855, %v1022
        %v1024 = vpop.f32.mrb[0].mxu0
        %1025 = vmatprep.mubr.bf16.mxu0 0
        %1026 = vmatmul.mubr.bf16.gmra.mrb[0].mxu0 %v832
        %v1027 = vpop.f32.mrb[0].mxu0
        %v1028 = vadd.f32 %v855, %v1027
        %v1029 = vpop.f32.mrb[0].mxu0
        %v1030 = vpop.f32.mrb[0].mxu0
        %v1031 = vadd.f32 %v855, %v1030
        %v1032 = vpop.f32.mrb[0].mxu0
        %1033 = vmatprep.mubr.bf16.mxu0 0
        %1034 = vmatmul.mubr.bf16.gmra.mrb[0].mxu0 %v833
        %v1035 = vpop.f32.mrb[0].mxu0
        %v1036 = vadd.f32 %v855, %v1035
        %v1037 = vpop.f32.mrb[0].mxu0
        %v1038 = vpop.f32.mrb[0].mxu0
        %v1039 = vadd.f32 %v855, %v1038
        %v1040 = vpop.f32.mrb[0].mxu0
        %1041 = vdwg.mxu0
        %v1042 = vmul.f32 %v940, 0.5
        %v1043 = vmul.f32 %v943, 0.5
        %v1044 = vmul.f32 %v948, 0.5
        %v1045 = vmul.f32 %v951, 0.5
        %v1046 = vmul.f32 %v956, 0.5
        %v1047 = vmul.f32 %v959, 0.5
        %v1048 = vmul.f32 %v964, 0.5
        %v1049 = vmul.f32 %v967, 0.5
        %v1050 = vmul.f32 %v972, 0.5
        %v1051 = vmul.f32 %v975, 0.5
        %v1052 = vmul.f32 %v980, 0.5
        %v1053 = vmul.f32 %v983, 0.5
        %v1054 = vmul.f32 %v988, 0.5
        %v1055 = vmul.f32 %v991, 0.5
        %v1056 = vmul.f32 %v996, 0.5
        %v1057 = vmul.f32 %v999, 0.5
        %v1058 = vmul.f32 %v1004, 0.5
        %v1059 = vmul.f32 %v1007, 0.5
        %v1060 = vmul.f32 %v1012, 0.5
        %v1061 = vmul.f32 %v1015, 0.5
        %v1062 = vmul.f32 %v1020, 0.5
        %v1063 = vmul.f32 %v1023, 0.5
        %v1064 = vmul.f32 %v1028, 0.5
        %v1065 = vmul.f32 %v1031, 0.5
        %v1066 = vmul.f32 %v1036, 0.5
        %v1067 = vmul.f32 %v1039, 0.5
        %v1068 = vmul.f32 %v940, 0.70710677
        %v1069 = vmul.f32 %v943, 0.70710677
        %v1070 = vmul.f32 %v948, 0.70710677
        %v1071 = vmul.f32 %v951, 0.70710677
        %v1072 = vmul.f32 %v956, 0.70710677
        %v1073 = vmul.f32 %v959, 0.70710677
        %v1074 = vmul.f32 %v964, 0.70710677
        %v1075 = vmul.f32 %v967, 0.70710677
        %v1076 = vmul.f32 %v972, 0.70710677
        %v1077 = vmul.f32 %v975, 0.70710677
        %v1078 = vmul.f32 %v980, 0.70710677
        %v1079 = vmul.f32 %v983, 0.70710677
        %v1080 = vmul.f32 %v988, 0.70710677
        %v1081 = vmul.f32 %v991, 0.70710677
        %v1082 = vmul.f32 %v996, 0.70710677
        %v1083 = vmul.f32 %v999, 0.70710677
        %v1084 = vmul.f32 %v1004, 0.70710677
        %v1085 = vmul.f32 %v1007, 0.70710677
        %v1086 = vmul.f32 %v1012, 0.70710677
        %v1087 = vmul.f32 %v1015, 0.70710677
        %v1088 = vmul.f32 %v1020, 0.70710677
        %v1089 = vmul.f32 %v1023, 0.70710677
        %v1090 = vmul.f32 %v1028, 0.70710677
        %v1091 = vmul.f32 %v1031, 0.70710677
        %v1092 = vmul.f32 %v1036, 0.70710677
        %v1093 = vmul.f32 %v1039, 0.70710677
        %v1094 = verf.f32.pop %v1068
        %v1095 = verf.f32.pop %v1069
        %v1096 = verf.f32.pop %v1070
        %v1097 = verf.f32.pop %v1071
        %v1098 = verf.f32.pop %v1072
        %v1099 = verf.f32.pop %v1073
        %v1100 = verf.f32.pop %v1074
        %v1101 = verf.f32.pop %v1075
        %v1102 = verf.f32.pop %v1076
        %v1103 = verf.f32.pop %v1077
        %v1104 = verf.f32.pop %v1078
        %v1105 = verf.f32.pop %v1079
        %v1106 = verf.f32.pop %v1080
        %v1107 = verf.f32.pop %v1081
        %v1108 = verf.f32.pop %v1082
        %v1109 = verf.f32.pop %v1083
        %v1110 = verf.f32.pop %v1084
        %v1111 = verf.f32.pop %v1085
        %v1112 = verf.f32.pop %v1086
        %v1113 = verf.f32.pop %v1087
        %v1114 = verf.f32.pop %v1088
        %v1115 = verf.f32.pop %v1089
        %v1116 = verf.f32.pop %v1090
        %v1117 = verf.f32.pop %v1091
        %v1118 = verf.f32.pop %v1092
        %v1119 = verf.f32.pop %v1093
        %v1120 = vadd.f32 %v1094, 1.0
        %v1121 = vadd.f32 %v1095, 1.0
        %v1122 = vadd.f32 %v1096, 1.0
        %v1123 = vadd.f32 %v1097, 1.0
        %v1124 = vadd.f32 %v1098, 1.0
        %v1125 = vadd.f32 %v1099, 1.0
        %v1126 = vadd.f32 %v1100, 1.0
        %v1127 = vadd.f32 %v1101, 1.0
        %v1128 = vadd.f32 %v1102, 1.0
        %v1129 = vadd.f32 %v1103, 1.0
        %v1130 = vadd.f32 %v1104, 1.0
        %v1131 = vadd.f32 %v1105, 1.0
        %v1132 = vadd.f32 %v1106, 1.0
        %v1133 = vadd.f32 %v1107, 1.0
        %v1134 = vadd.f32 %v1108, 1.0
        %v1135 = vadd.f32 %v1109, 1.0
        %v1136 = vadd.f32 %v1110, 1.0
        %v1137 = vadd.f32 %v1111, 1.0
        %v1138 = vadd.f32 %v1112, 1.0
        %v1139 = vadd.f32 %v1113, 1.0
        %v1140 = vadd.f32 %v1114, 1.0
        %v1141 = vadd.f32 %v1115, 1.0
        %v1142 = vadd.f32 %v1116, 1.0
        %v1143 = vadd.f32 %v1117, 1.0
        %v1144 = vadd.f32 %v1118, 1.0
        %v1145 = vadd.f32 %v1119, 1.0
        %v1146 = vmul.f32 %v1042, %v1120
        %v1147 = vmul.f32 %v1043, %v1121
        %v1148 = vmul.f32 %v1044, %v1122
        %v1149 = vmul.f32 %v1045, %v1123
        %v1150 = vmul.f32 %v1046, %v1124
        %v1151 = vmul.f32 %v1047, %v1125
        %v1152 = vmul.f32 %v1048, %v1126
        %v1153 = vmul.f32 %v1049, %v1127
        %v1154 = vmul.f32 %v1050, %v1128
        %v1155 = vmul.f32 %v1051, %v1129
        %v1156 = vmul.f32 %v1052, %v1130
        %v1157 = vmul.f32 %v1053, %v1131
        %v1158 = vmul.f32 %v1054, %v1132
        %v1159 = vmul.f32 %v1055, %v1133
        %v1160 = vmul.f32 %v1056, %v1134
        %v1161 = vmul.f32 %v1057, %v1135
        %v1162 = vmul.f32 %v1058, %v1136
        %v1163 = vmul.f32 %v1059, %v1137
        %v1164 = vmul.f32 %v1060, %v1138
        %v1165 = vmul.f32 %v1061, %v1139
        %v1166 = vmul.f32 %v1062, %v1140
        %v1167 = vmul.f32 %v1063, %v1141
        %v1168 = vmul.f32 %v1064, %v1142
        %v1169 = vmul.f32 %v1065, %v1143
        %v1170 = vmul.f32 %v1066, %v1144
        %v1171 = vmul.f32 %v1067, %v1145
        %v1172 = vld [vmem:[#allocation3] sm:$0xff]
        %v1173 = vld [vmem:[#allocation3 + $0x8] sm:$0xff]
        %v1174 = vld [vmem:[#allocation3 + $0x10] sm:$0xff]
        %v1175 = vld [vmem:[#allocation3 + $0x18] sm:$0xff]
        %v1176 = vld [vmem:[#allocation3 + $0x20] sm:$0xff]
        %v1177 = vld [vmem:[#allocation3 + $0x28] sm:$0xff]
        %v1178 = vld [vmem:[#allocation3 + $0x30] sm:$0xff]
        %v1179 = vld [vmem:[#allocation3 + $0x38] sm:$0xff]
        %v1180 = vld [vmem:[#allocation3 + $0x40] sm:$0xff]
        %v1181 = vld [vmem:[#allocation3 + $0x48] sm:$0xff]
        %v1182 = vld [vmem:[#allocation3 + $0x50] sm:$0xff]
        %v1183 = vld [vmem:[#allocation3 + $0x58] sm:$0xff]
        %v1184 = vld [vmem:[#allocation3 + $0x60] sm:$0xff]
        %v1185 = vld [vmem:[#allocation3 + $0x68] sm:$0xff]
        %v1186 = vld [vmem:[#allocation3 + $0x70] sm:$0xff]
        %v1187 = vld [vmem:[#allocation3 + $0x78] sm:$0xff]
        %v1188 = vld [vmem:[#allocation3 + $0x80] sm:$0xff]
        %v1189 = vld [vmem:[#allocation3 + $0x88] sm:$0xff]
        %v1190 = vld [vmem:[#allocation3 + $0x90] sm:$0xff]
        %v1191 = vld [vmem:[#allocation3 + $0x98] sm:$0xff]
        %v1192 = vld [vmem:[#allocation3 + $0xa0] sm:$0xff]
        %v1193 = vld [vmem:[#allocation3 + $0xa8] sm:$0xff]
        %v1194 = vld [vmem:[#allocation3 + $0xb0] sm:$0xff]
        %v1195 = vld [vmem:[#allocation3 + $0xb8] sm:$0xff]
        %v1196 = vld [vmem:[#allocation3 + $0xc0] sm:$0xff]
        %v1197 = vld [vmem:[#allocation3 + $0xc8] sm:$0xff]
        %v1198 = vpack.c.bf16 %v1147, %v1146
        %v1199 = vpack.c.bf16 %v1149, %v1148
        %v1200 = vpack.c.bf16 %v1151, %v1150
        %v1201 = vpack.c.bf16 %v1153, %v1152
        %v1202 = vpack.c.bf16 %v1155, %v1154
        %v1203 = vpack.c.bf16 %v1157, %v1156
        %v1204 = vpack.c.bf16 %v1159, %v1158
        %v1205 = vpack.c.bf16 %v1161, %v1160
        %v1206 = vpack.c.bf16 %v1163, %v1162
        %v1207 = vpack.c.bf16 %v1165, %v1164
        %v1208 = vpack.c.bf16 %v1167, %v1166
        %v1209 = vpack.c.bf16 %v1169, %v1168
        %v1210 = vpack.c.bf16 %v1171, %v1170
        %v1211 = vld [vmem:[%s338] sm:$0xf]
        %v1212 = vld [vmem:[%s338 + $0x4] sm:$0xf]
        %v1213 = vld [vmem:[%s338 + $0x8] sm:$0xf]
        %v1214 = vld [vmem:[%s338 + $0xc] sm:$0xf]
        %v1215 = vld [vmem:[%s338 + $0x10] sm:$0xf]
        %v1216 = vld [vmem:[%s338 + $0x14] sm:$0xf]
        %v1217 = vld [vmem:[%s338 + $0x18] sm:$0xf]
        %v1218 = vld [vmem:[%s338 + $0x1c] sm:$0xf]
        %v1219 = vld [vmem:[%s338 + $0x20] sm:$0xf]
        %v1220 = vld [vmem:[%s338 + $0x24] sm:$0xf]
        %v1221 = vld [vmem:[%s338 + $0x28] sm:$0xf]
        %v1222 = vld [vmem:[%s338 + $0x2c] sm:$0xf]
        %v1223 = vld [vmem:[%s338 + $0x30] sm:$0xf]
        %v1224 = vld [vmem:[%s338 + $0x34] sm:$0xf]
        %v1225 = vld [vmem:[%s338 + $0x38] sm:$0xf]
        %v1226 = vld [vmem:[%s338 + $0x3c] sm:$0xf]
        %v1243 = vunpack.c.l.b16 %v1211
        %v1244 = vunpack.c.l.b16 %v1212
        %v1245 = vunpack.c.l.b16 %v1213
        %v1246 = vunpack.c.l.b16 %v1214
        %v1247 = vunpack.c.l.b16 %v1215
        %v1248 = vunpack.c.l.b16 %v1216
        %v1249 = vunpack.c.l.b16 %v1217
        %v1250 = vunpack.c.l.b16 %v1218
        %v1251 = vunpack.c.l.b16 %v1219
        %v1252 = vunpack.c.l.b16 %v1220
        %v1253 = vunpack.c.l.b16 %v1221
        %v1254 = vunpack.c.l.b16 %v1222
        %v1255 = vunpack.c.l.b16 %v1223
        %v1256 = vunpack.c.l.b16 %v1224
        %v1257 = vunpack.c.l.b16 %v1225
        %v1258 = vunpack.c.l.b16 %v1226
        %v1259 = vpack.c.b16 %v1244, %v1243
        %v1260 = vpack.c.b16 %v1246, %v1245
        %v1261 = vpack.c.b16 %v1248, %v1247
        %v1262 = vpack.c.b16 %v1250, %v1249
        %v1263 = vpack.c.b16 %v1252, %v1251
        %v1264 = vpack.c.b16 %v1254, %v1253
        %v1265 = vpack.c.b16 %v1256, %v1255
        %v1266 = vpack.c.b16 %v1258, %v1257
        %1275 = vmatprep.subr.bf16.mxu0 0
        %1276 = vmatpush1.bf16.msra.mxu0 %v1259
        %1277 = vmatprep.subr.bf16.mxu0 0
        %1278 = vmatpush1.bf16.msra.mxu0 %v1260
        %1279 = vmatprep.subr.bf16.mxu0 0
        %1280 = vmatpush1.bf16.msra.mxu0 %v1261
        %1281 = vmatprep.subr.bf16.mxu0 0
        %1282 = vmatpush1.bf16.msra.mxu0 %v1262
        %1283 = vmatprep.subr.bf16.mxu0 0
        %1284 = vmatpush1.bf16.msra.mxu0 %v1263
        %1285 = vmatprep.subr.bf16.mxu0 0
        %1286 = vmatpush1.bf16.msra.mxu0 %v1264
        %1287 = vmatprep.subr.bf16.mxu0 0
        %1288 = vmatpush1.bf16.msra.mxu0 %v1265
        %1289 = vmatprep.subr.bf16.mxu0 0
        %1290 = vmatpush1.bf16.msra.mxu0 %v1266
        %1291 = vmatprep.subr.bf16.mxu0 0
        %1292 = vmatpush1.bf16.msra.mxu0 0
        %1293 = vmatprep.subr.bf16.mxu0 0
        %1294 = vmatpush1.bf16.msra.mxu0 0
        %1295 = vmatprep.subr.bf16.mxu0 0
        %1296 = vmatpush1.bf16.msra.mxu0 0
        %1297 = vmatprep.subr.bf16.mxu0 0
        %1298 = vmatpush1.bf16.msra.mxu0 0
        %1299 = vmatprep.subr.bf16.mxu0 0
        %1300 = vmatpush1.bf16.msra.mxu0 0
        %1301 = vmatprep.subr.bf16.mxu0 0
        %1302 = vmatpush1.bf16.msra.mxu0 0
        %1303 = vmatprep.subr.bf16.mxu0 0
        %1304 = vmatpush1.bf16.msra.mxu0 0
        %1305 = vmatprep.subr.bf16.mxu0 0
        %1306 = vmatpush1.bf16.msra.mxu0 0
        %1307 = vmatprep.mubr.bf16.mxu0 0
        %1308 = vmatmul.mubr.bf16.gmra.mrb[0].mxu0 %v1198
        %v1309 = vpop.f32.mrb[0].mxu0
        %v1310 = vadd.f32 0.0, %v1309
        %v1311 = vpop.f32.mrb[0].mxu0
        %v1312 = vpop.f32.mrb[0].mxu0
        %v1313 = vadd.f32 0.0, %v1312
        %v1314 = vpop.f32.mrb[0].mxu0
        %1315 = vmatprep.mubr.bf16.mxu0 0
        %1316 = vmatmul.mubr.bf16.gmra.mrb[0].mxu0 %v1199
        %v1317 = vpop.f32.mrb[0].mxu0
        %v1318 = vadd.f32 0.0, %v1317
        %v1319 = vpop.f32.mrb[0].mxu0
        %v1320 = vpop.f32.mrb[0].mxu0
        %v1321 = vadd.f32 0.0, %v1320
        %v1322 = vpop.f32.mrb[0].mxu0
        %1323 = vmatprep.mubr.bf16.mxu0 0
        %1324 = vmatmul.mubr.bf16.gmra.mrb[0].mxu0 %v1200
        %v1325 = vpop.f32.mrb[0].mxu0
        %v1326 = vadd.f32 0.0, %v1325
        %v1327 = vpop.f32.mrb[0].mxu0
        %v1328 = vpop.f32.mrb[0].mxu0
        %v1329 = vadd.f32 0.0, %v1328
        %v1330 = vpop.f32.mrb[0].mxu0
        %1331 = vmatprep.mubr.bf16.mxu0 0
        %1332 = vmatmul.mubr.bf16.gmra.mrb[0].mxu0 %v1201
        %v1333 = vpop.f32.mrb[0].mxu0
        %v1334 = vadd.f32 0.0, %v1333
        %v1335 = vpop.f32.mrb[0].mxu0
        %v1336 = vpop.f32.mrb[0].mxu0
        %v1337 = vadd.f32 0.0, %v1336
        %v1338 = vpop.f32.mrb[0].mxu0
        %1339 = vmatprep.mubr.bf16.mxu0 0
        %1340 = vmatmul.mubr.bf16.gmra.mrb[0].mxu0 %v1202
        %v1341 = vpop.f32.mrb[0].mxu0
        %v1342 = vadd.f32 0.0, %v1341
        %v1343 = vpop.f32.mrb[0].mxu0
        %v1344 = vpop.f32.mrb[0].mxu0
        %v1345 = vadd.f32 0.0, %v1344
        %v1346 = vpop.f32.mrb[0].mxu0
        %1347 = vmatprep.mubr.bf16.mxu0 0
        %1348 = vmatmul.mubr.bf16.gmra.mrb[0].mxu0 %v1203
        %v1349 = vpop.f32.mrb[0].mxu0
        %v1350 = vadd.f32 0.0, %v1349
        %v1351 = vpop.f32.mrb[0].mxu0
        %v1352 = vpop.f32.mrb[0].mxu0
        %v1353 = vadd.f32 0.0, %v1352
        %v1354 = vpop.f32.mrb[0].mxu0
        %1355 = vmatprep.mubr.bf16.mxu0 0
        %1356 = vmatmul.mubr.bf16.gmra.mrb[0].mxu0 %v1204
        %v1357 = vpop.f32.mrb[0].mxu0
        %v1358 = vadd.f32 0.0, %v1357
        %v1359 = vpop.f32.mrb[0].mxu0
        %v1360 = vpop.f32.mrb[0].mxu0
        %v1361 = vadd.f32 0.0, %v1360
        %v1362 = vpop.f32.mrb[0].mxu0
        %1363 = vmatprep.mubr.bf16.mxu0 0
        %1364 = vmatmul.mubr.bf16.gmra.mrb[0].mxu0 %v1205
        %v1365 = vpop.f32.mrb[0].mxu0
        %v1366 = vadd.f32 0.0, %v1365
        %v1367 = vpop.f32.mrb[0].mxu0
        %v1368 = vpop.f32.mrb[0].mxu0
        %v1369 = vadd.f32 0.0, %v1368
        %v1370 = vpop.f32.mrb[0].mxu0
        %1371 = vmatprep.mubr.bf16.mxu0 0
        %1372 = vmatmul.mubr.bf16.gmra.mrb[0].mxu0 %v1206
        %v1373 = vpop.f32.mrb[0].mxu0
        %v1374 = vadd.f32 0.0, %v1373
        %v1375 = vpop.f32.mrb[0].mxu0
        %v1376 = vpop.f32.mrb[0].mxu0
        %v1377 = vadd.f32 0.0, %v1376
        %v1378 = vpop.f32.mrb[0].mxu0
        %1379 = vmatprep.mubr.bf16.mxu0 0
        %1380 = vmatmul.mubr.bf16.gmra.mrb[0].mxu0 %v1207
        %v1381 = vpop.f32.mrb[0].mxu0
        %v1382 = vadd.f32 0.0, %v1381
        %v1383 = vpop.f32.mrb[0].mxu0
        %v1384 = vpop.f32.mrb[0].mxu0
        %v1385 = vadd.f32 0.0, %v1384
        %v1386 = vpop.f32.mrb[0].mxu0
        %1387 = vmatprep.mubr.bf16.mxu0 0
        %1388 = vmatmul.mubr.bf16.gmra.mrb[0].mxu0 %v1208
        %v1389 = vpop.f32.mrb[0].mxu0
        %v1390 = vadd.f32 0.0, %v1389
        %v1391 = vpop.f32.mrb[0].mxu0
        %v1392 = vpop.f32.mrb[0].mxu0
        %v1393 = vadd.f32 0.0, %v1392
        %v1394 = vpop.f32.mrb[0].mxu0
        %1395 = vmatprep.mubr.bf16.mxu0 0
        %1396 = vmatmul.mubr.bf16.gmra.mrb[0].mxu0 %v1209
        %v1397 = vpop.f32.mrb[0].mxu0
        %v1398 = vadd.f32 0.0, %v1397
        %v1399 = vpop.f32.mrb[0].mxu0
        %v1400 = vpop.f32.mrb[0].mxu0
        %v1401 = vadd.f32 0.0, %v1400
        %v1402 = vpop.f32.mrb[0].mxu0
        %1403 = vmatprep.mubr.bf16.mxu0 0
        %1404 = vmatmul.mubr.bf16.gmra.mrb[0].mxu0 %v1210
        %v1405 = vpop.f32.mrb[0].mxu0
        %v1406 = vadd.f32 0.0, %v1405
        %v1407 = vpop.f32.mrb[0].mxu0
        %v1408 = vpop.f32.mrb[0].mxu0
        %v1409 = vadd.f32 0.0, %v1408
        %v1410 = vpop.f32.mrb[0].mxu0
        %1411 = vdwg.mxu0
        %v1412 = vadd.f32 %v1172, %v1310
        %v1413 = vadd.f32 %v1173, %v1313
        %v1414 = vadd.f32 %v1174, %v1318
        %v1415 = vadd.f32 %v1175, %v1321
        %v1416 = vadd.f32 %v1176, %v1326
        %v1417 = vadd.f32 %v1177, %v1329
        %v1418 = vadd.f32 %v1178, %v1334
        %v1419 = vadd.f32 %v1179, %v1337
        %v1420 = vadd.f32 %v1180, %v1342
        %v1421 = vadd.f32 %v1181, %v1345
        %v1422 = vadd.f32 %v1182, %v1350
        %v1423 = vadd.f32 %v1183, %v1353
        %v1424 = vadd.f32 %v1184, %v1358
        %v1425 = vadd.f32 %v1185, %v1361
        %v1426 = vadd.f32 %v1186, %v1366
        %v1427 = vadd.f32 %v1187, %v1369
        %v1428 = vadd.f32 %v1188, %v1374
        %v1429 = vadd.f32 %v1189, %v1377
        %v1430 = vadd.f32 %v1190, %v1382
        %v1431 = vadd.f32 %v1191, %v1385
        %v1432 = vadd.f32 %v1192, %v1390
        %v1433 = vadd.f32 %v1193, %v1393
        %v1434 = vadd.f32 %v1194, %v1398
        %v1435 = vadd.f32 %v1195, %v1401
        %v1436 = vadd.f32 %v1196, %v1406
        %v1437 = vadd.f32 %v1197, %v1409
        %1438 = vst [vmem:[#allocation3] sm:$0xff] %v1412
        %1439 = vst [vmem:[#allocation3 + $0x8] sm:$0xff] %v1413
        %1440 = vst [vmem:[#allocation3 + $0x10] sm:$0xff] %v1414
        %1441 = vst [vmem:[#allocation3 + $0x18] sm:$0xff] %v1415
        %1442 = vst [vmem:[#allocation3 + $0x20] sm:$0xff] %v1416
        %1443 = vst [vmem:[#allocation3 + $0x28] sm:$0xff] %v1417
        %1444 = vst [vmem:[#allocation3 + $0x30] sm:$0xff] %v1418
        %1445 = vst [vmem:[#allocation3 + $0x38] sm:$0xff] %v1419
        %1446 = vst [vmem:[#allocation3 + $0x40] sm:$0xff] %v1420
        %1447 = vst [vmem:[#allocation3 + $0x48] sm:$0xff] %v1421
        %1448 = vst [vmem:[#allocation3 + $0x50] sm:$0xff] %v1422
        %1449 = vst [vmem:[#allocation3 + $0x58] sm:$0xff] %v1423
        %1450 = vst [vmem:[#allocation3 + $0x60] sm:$0xff] %v1424
        %1451 = vst [vmem:[#allocation3 + $0x68] sm:$0xff] %v1425
        %1452 = vst [vmem:[#allocation3 + $0x70] sm:$0xff] %v1426
        %1453 = vst [vmem:[#allocation3 + $0x78] sm:$0xff] %v1427
        %1454 = vst [vmem:[#allocation3 + $0x80] sm:$0xff] %v1428
        %1455 = vst [vmem:[#allocation3 + $0x88] sm:$0xff] %v1429
        %1456 = vst [vmem:[#allocation3 + $0x90] sm:$0xff] %v1430
        %1457 = vst [vmem:[#allocation3 + $0x98] sm:$0xff] %v1431
        %1458 = vst [vmem:[#allocation3 + $0xa0] sm:$0xff] %v1432
        %1459 = vst [vmem:[#allocation3 + $0xa8] sm:$0xff] %v1433
        %1460 = vst [vmem:[#allocation3 + $0xb0] sm:$0xff] %v1434
        %1461 = vst [vmem:[#allocation3 + $0xb8] sm:$0xff] %v1435
        %1462 = vst [vmem:[#allocation3 + $0xc0] sm:$0xff] %v1436
        %1463 = vst [vmem:[#allocation3 + $0xc8] sm:$0xff] %v1437
        %p1464 = scmp.eq.s32.totalorder %s28, 2
        // Predicated region
        $region65: #{tpu_custom_call.1} parent=47 // pred_check
          %p1465 = pneg %p1464
        $region66: #{tpu_custom_call.1} parent=47 // pred_check_branch
          %1467 = sbr.rel (%p1465) target = $region68
        $region67: #{tpu_custom_call.1} parent=47 // pred_region
          %v1468 = vld [vmem:[#allocation3] sm:$0xff]
          %v1469 = vld [vmem:[#allocation3 + $0x8] sm:$0xff]
          %v1470 = vld [vmem:[#allocation3 + $0x10] sm:$0xff]
          %v1471 = vld [vmem:[#allocation3 + $0x18] sm:$0xff]
          %v1472 = vld [vmem:[#allocation3 + $0x20] sm:$0xff]
          %v1473 = vld [vmem:[#allocation3 + $0x28] sm:$0xff]
          %v1474 = vld [vmem:[#allocation3 + $0x30] sm:$0xff]
          %v1475 = vld [vmem:[#allocation3 + $0x38] sm:$0xff]
          %v1476 = vld [vmem:[#allocation3 + $0x40] sm:$0xff]
          %v1477 = vld [vmem:[#allocation3 + $0x48] sm:$0xff]
          %v1478 = vld [vmem:[#allocation3 + $0x50] sm:$0xff]
          %v1479 = vld [vmem:[#allocation3 + $0x58] sm:$0xff]
          %v1480 = vld [vmem:[#allocation3 + $0x60] sm:$0xff]
          %v1481 = vld [vmem:[#allocation3 + $0x68] sm:$0xff]
          %v1482 = vld [vmem:[#allocation3 + $0x70] sm:$0xff]
          %v1483 = vld [vmem:[#allocation3 + $0x78] sm:$0xff]
          %v1484 = vld [vmem:[#allocation3 + $0x80] sm:$0xff]
          %v1485 = vld [vmem:[#allocation3 + $0x88] sm:$0xff]
          %v1486 = vld [vmem:[#allocation3 + $0x90] sm:$0xff]
          %v1487 = vld [vmem:[#allocation3 + $0x98] sm:$0xff]
          %v1488 = vld [vmem:[#allocation3 + $0xa0] sm:$0xff]
          %v1489 = vld [vmem:[#allocation3 + $0xa8] sm:$0xff]
          %v1490 = vld [vmem:[#allocation3 + $0xb0] sm:$0xff]
          %v1491 = vld [vmem:[#allocation3 + $0xb8] sm:$0xff]
          %v1492 = vld [vmem:[#allocation3 + $0xc0] sm:$0xff]
          %v1493 = vld [vmem:[#allocation3 + $0xc8] sm:$0xff]
          %1494 = vst [vmem:[#allocation10] sm:$0xff] %v1468
          %1495 = vst [vmem:[#allocation10 + $0x8] sm:$0xff] %v1469
          %1496 = vst [vmem:[#allocation10 + $0x10] sm:$0xff] %v1470
          %1497 = vst [vmem:[#allocation10 + $0x18] sm:$0xff] %v1471
          %1498 = vst [vmem:[#allocation10 + $0x20] sm:$0xff] %v1472
          %1499 = vst [vmem:[#allocation10 + $0x28] sm:$0xff] %v1473
          %1500 = vst [vmem:[#allocation10 + $0x30] sm:$0xff] %v1474
          %1501 = vst [vmem:[#allocation10 + $0x38] sm:$0xff] %v1475
          %1502 = vst [vmem:[#allocation10 + $0x40] sm:$0xff] %v1476
          %1503 = vst [vmem:[#allocation10 + $0x48] sm:$0xff] %v1477
          %1504 = vst [vmem:[#allocation10 + $0x50] sm:$0xff] %v1478
          %1505 = vst [vmem:[#allocation10 + $0x58] sm:$0xff] %v1479
          %1506 = vst [vmem:[#allocation10 + $0x60] sm:$0xff] %v1480
          %1507 = vst [vmem:[#allocation10 + $0x68] sm:$0xff] %v1481
          %1508 = vst [vmem:[#allocation10 + $0x70] sm:$0xff] %v1482
          %1509 = vst [vmem:[#allocation10 + $0x78] sm:$0xff] %v1483
          %1510 = vst [vmem:[#allocation10 + $0x80] sm:$0xff] %v1484
          %1511 = vst [vmem:[#allocation10 + $0x88] sm:$0xff] %v1485
          %1512 = vst [vmem:[#allocation10 + $0x90] sm:$0xff] %v1486
          %1513 = vst [vmem:[#allocation10 + $0x98] sm:$0xff] %v1487
          %1514 = vst [vmem:[#allocation10 + $0xa0] sm:$0xff] %v1488
          %1515 = vst [vmem:[#allocation10 + $0xa8] sm:$0xff] %v1489
          %1516 = vst [vmem:[#allocation10 + $0xb0] sm:$0xff] %v1490
          %1517 = vst [vmem:[#allocation10 + $0xb8] sm:$0xff] %v1491
          %1518 = vst [vmem:[#allocation10 + $0xc0] sm:$0xff] %v1492
          %1519 = vst [vmem:[#allocation10 + $0xc8] sm:$0xff] %v1493
        $region68: #{tpu_custom_call.1} parent=47 // pred_fallthru
          _
        // Predicated region
        $region69: #{tpu_custom_call.1} parent=47 // pred_check
          %p1520 = pneg %p220
        $region70: #{tpu_custom_call.1} parent=47 // pred_check_branch
          %1522 = sbr.rel (%p1520) target = $region72
        $region71: #{tpu_custom_call.1} parent=47 // pred_region
          %s1523 = smul.u32 26, %s27
          %s1525 = ssub.s32 3328, 3328
          %1526 = vsyncadd [#allocation6], %s1525
          %s1527 = smul.addr %s1523, 128
          %s1528 = scalar_lea.hbm %s7, %s1527
          %s1529 = sshll.u32 [#allocation10], 4
          %s1530 = int_to_ptr.vmem [resolvable:$true] %s1529
          %1535 = dma.vmem_to_hbm [thread:$0]  %s1530, 3328, %s1528, [#allocation6], 128, 128, 8
        $region72: #{tpu_custom_call.1} parent=47 // pred_fallthru
          _
        // Predicated region
        $region73: #{tpu_custom_call.1} parent=47 // pred_check
          %p1536 = pneg %p220
        $region74: #{tpu_custom_call.1} parent=47 // pred_check_branch
          %1538 = sbr.rel (%p1536) target = $region76
        $region75: #{tpu_custom_call.1} parent=47 // pred_region
          %1539 = dma.done [#allocation6], 3328
        $region76: #{tpu_custom_call.1} parent=47 // pred_fallthru
          _
      $region48: #{tpu_custom_call.1} parent=5 // pred_fallthru
        _
      %p1540 = scmp.le.s32.totalorder 2, %s18
      // Predicated region
      $region77: #{tpu_custom_call.1} parent=5 // pred_check
        %p1541 = pneg %p1540
      $region78: #{tpu_custom_call.1} parent=5 // pred_check_branch
        %1543 = sbr.rel (%p1541) target = $region80
      $region79: #{tpu_custom_call.1} parent=5 // pred_region
        %s1544 = ssub.s32 %s18, 2
      $region80: #{tpu_custom_call.1} parent=5 // pred_fallthru
        _
    $region6: #{tpu_custom_call.1} parent=1 // loop_footer
      %s22 = sadd.s32 1, %s18
    $region7: #{tpu_custom_call.1} parent=1 // loop_footer_branch
      %17 = sbr.rel target = $region3
    $region8: #{tpu_custom_call.1} parent=1 // loop_exit
      _
    %1545 = vsyncpa [#allocation5], 1
    %s1546 = scalar_lea.sflag [#allocation5], 1
    %1547 = vsyncpa %s1546, 1
    %1548 = vsyncpa [#allocation8], 1
    %s1549 = scalar_lea.sflag [#allocation8], 1
    %1550 = vsyncpa %s1549, 1
    %1551 = vsyncpa [#allocation6], 1
    %s1552 = scalar_lea.sflag [#allocation6], 1
    %1553 = vsyncpa %s1552, 1

</llo_original>
